<compile_context>
chip_gen: v6e
topology: v6e:2x2x1
jax: 0.10.0
libtpu: 0.0.40
codegen_flags: <defaults>
</compile_context>

<pallas_src>
import jax
import jax.numpy as jnp
from jax.experimental import pallas as pl
from jax.experimental.pallas import tpu as pltpu


def se_scale_kernel(a_ref, w_ref, b_ref, x_ref, o_ref):
    # ReLU on the squeezed SE input (C_in, 1) in f32 (VPU); cast only the MXU feed to bf16.
    a = jnp.maximum(a_ref[...], 0.0).astype(w_ref.dtype)                  # (C_in, 1)
    # 1x1 conv on a 1x1 spatial map == W @ a, f32 accumulation on the MXU.
    s = jnp.dot(w_ref[...], a, preferred_element_type=jnp.float32)        # (C_out, 1)
    # Bias + sigmoid gate in f32 (EUP).
    s = jax.nn.sigmoid(s + b_ref[...])                                     # (C_out, 1)
    # Channel-wise scale: gate column broadcasts across the H*W lane dim (VPU).
    o_ref[...] = x_ref[...] * s                                            # (C_out, HW)


def prepare_params(weight, bias):
    """One-time parameter preprocessing, done OUTSIDE the per-call jit.

    weight: (C_out, C_in, 1, 1) f32  ->  (C_out, C_in) bf16
    bias:   (C_out,)            f32  ->  (C_out, 1)    f32
    """
    c_out, c_in = weight.shape[:2]
    w_bf16 = jnp.asarray(weight).reshape(c_out, c_in).astype(jnp.bfloat16)
    b_col = jnp.asarray(bias).reshape(c_out, 1).astype(jnp.float32)
    return w_bf16, b_col


@jax.jit
def se_module_forward(x227, x225, w_bf16, b_col):
    """Replicates M.forward(x227, x225).

    x227:   (1, C_in, 1, 1)  float32
    x225:   (1, C_out, H, W) float32
    w_bf16: (C_out, C_in)    bfloat16  (pre-cast once via prepare_params)
    b_col:  (C_out, 1)       float32
    returns (1, C_out, H, W) float32
    """
    _, c_in, _, _ = x227.shape
    _, c_out, h, w = x225.shape
    hw = h * w

    # Transpose-free, contiguous reshapes (no extra HBM traffic).
    a = x227.reshape(c_in, 1)                     # (C_in, 1)
    x_mat = x225.reshape(c_out, hw)               # (C_out, HW)

    cost = pl.CostEstimate(
        flops=2 * c_out * c_in + 3 * c_out * hw,          # matvec + bias/sigmoid-adjacent + scale
        transcendentals=c_out,                            # one sigmoid per output channel
        bytes_accessed=(a.size * 4 + w_bf16.size * 2 + b_col.size * 4
                        + 2 * x_mat.size * 4),            # ~0.62 MB total
    )

    out_mat = pl.pallas_call(
        se_scale_kernel,
        out_shape=jax.ShapeDtypeStruct((c_out, hw), jnp.float32),
        in_specs=[
            pl.BlockSpec(memory_space=pltpu.VMEM),
            pl.BlockSpec(memory_space=pltpu.VMEM),
            pl.BlockSpec(memory_space=pltpu.VMEM),
            pl.BlockSpec(memory_space=pltpu.VMEM),
        ],
        out_specs=pl.BlockSpec(memory_space=pltpu.VMEM),
        cost_estimate=cost,
    )(a, w_bf16, b_col, x_mat)

    # Back to NCHW without any transpose.
    return out_mat.reshape(1, c_out, h, w)


def reference_forward(x227, x225, weight, bias):
    """Pure-JAX f32 reference matching the PyTorch module."""
    a = jnp.maximum(x227.reshape(1, -1), 0.0)                         # (1, C_in)
    s = a @ weight.reshape(weight.shape[0], weight.shape[1]).T + bias[None, :]
    s = jax.nn.sigmoid(s)                                             # (1, C_out)
    return x225 * s[0][None, :, None, None]


if __name__ == "__main__":
    key = jax.random.PRNGKey(0)
    k1, k2, k3, k4 = jax.random.split(key, 4)

    C_IN, C_OUT, H, W = 196, 784, 7, 7

    # Deterministic synthetic parameters (shapes from Conv2d(196, 784, kernel_size=1)).
    fan_in = C_IN
    bound = 1.0 / (fan_in ** 0.5)
    weight = jax.random.uniform(k1, (C_OUT, C_IN, 1, 1), jnp.float32, -bound, bound)
    bias = jax.random.uniform(k2, (C_OUT,), jnp.float32, -bound, bound)

    # Inputs.
    x227 = jax.random.normal(k3, (1, C_IN, 1, 1), jnp.float32)
    x225 = jax.random.normal(k4, (1, C_OUT, H, W), jnp.float32)

    # One-time weight preprocessing (outside the jitted forward).
    w_bf16, b_col = prepare_params(weight, bias)

    out = se_module_forward(x227, x225, w_bf16, b_col)
    out = jax.block_until_ready(out)

    ref = reference_forward(x227, x225, weight, bias)
    assert out.shape == (1, C_OUT, H, W)
    # bf16 weight/activation on the MXU (f32 accumulation) => small quantization error
    # in the sigmoid gate vs the f32 reference.
    assert jnp.allclose(out, ref, atol=2e-2, rtol=2e-2), float(jnp.max(jnp.abs(out - ref)))

    print("KERNEL_OK")
</pallas_src>

<mosaic_0001>
module attributes {stable_mosaic.version = 11 : i64} {
  func.func @se_scale_kernel(%arg0: memref<196x1xf32, #tpu.memory_space<vmem>>, %arg1: memref<784x196xbf16, #tpu.memory_space<vmem>>, %arg2: memref<784x1xf32, #tpu.memory_space<vmem>>, %arg3: memref<784x49xf32, #tpu.memory_space<vmem>>, %arg4: memref<784x49xf32, #tpu.memory_space<vmem>>) attributes {dimension_semantics = [], scalar_prefetch = 0 : i64, scratch_operands = 0 : i64, tpu.core_type = #tpu.core_type<tc>} {
    %c0 = arith.constant 0 : index
    %c0_0 = arith.constant 0 : index
    %0 = vector.load %arg0[%c0, %c0_0] : memref<196x1xf32, #tpu.memory_space<vmem>>, vector<196x1xf32>
    %cst = arith.constant 0.000000e+00 : f32
    %1 = vector.broadcast %cst : f32 to vector<196x1xf32>
    %2 = arith.maximumf %0, %1 : vector<196x1xf32>
    %3 = arith.truncf %2 : vector<196x1xf32> to vector<196x1xbf16>
    %c0_1 = arith.constant 0 : index
    %c0_2 = arith.constant 0 : index
    %4 = vector.load %arg1[%c0_1, %c0_2] : memref<784x196xbf16, #tpu.memory_space<vmem>>, vector<784x196xbf16>
    %cst_3 = arith.constant dense<0.000000e+00> : vector<784x1xf32>
    %5 = tpu.matmul %4, %3, %cst_3 {dimension_numbers = #tpu.dot_dimension_numbers<[1], [0], [0], [1], [0, 0, 1, 1], [], []>} : vector<784x196xbf16>, vector<196x1xbf16>, vector<784x1xf32> -> vector<784x1xf32>
    %c0_4 = arith.constant 0 : index
    %c0_5 = arith.constant 0 : index
    %6 = vector.load %arg2[%c0_4, %c0_5] : memref<784x1xf32, #tpu.memory_space<vmem>>, vector<784x1xf32>
    %7 = arith.addf %5, %6 : vector<784x1xf32>
    %8 = arith.negf %7 : vector<784x1xf32>
    %9 = math.exp %8 : vector<784x1xf32>
    %cst_6 = arith.constant 1.000000e+00 : f32
    %10 = vector.broadcast %cst_6 : f32 to vector<784x1xf32>
    %11 = arith.addf %10, %9 : vector<784x1xf32>
    %12 = arith.divf %10, %11 : vector<784x1xf32>
    %c0_7 = arith.constant 0 : index
    %c0_8 = arith.constant 0 : index
    %13 = vector.load %arg3[%c0_7, %c0_8] : memref<784x49xf32, #tpu.memory_space<vmem>>, vector<784x49xf32>
    %14 = vector.broadcast %12 : vector<784x1xf32> to vector<784x49xf32>
    %15 = arith.mulf %13, %14 : vector<784x49xf32>
    %c0_9 = arith.constant 0 : index
    %c0_10 = arith.constant 0 : index
    %16 = vector.load %arg4[%c0_9, %c0_10] : memref<784x49xf32, #tpu.memory_space<vmem>>, vector<784x49xf32>
    tpu.vector_store %arg4[%c0_9, %c0_10], %15 {strides = array<i32>} : memref<784x49xf32, #tpu.memory_space<vmem>>, vector<784x49xf32>,
    return
  }
}

</mosaic_0001>

<llo_original>
// kernel: se_module_forward.1
$region0: #{se_module_forward.1}
  #allocation0 [shape = 'u32[]', space=smem, size = 0x4, offset = 0x4, fixed_abs, tag = 'smem constant byte address 0x4 - core index']
  #allocation1 [shape = 'u32[144,128]{1,0:T(1,128)}', space=vmem, size = 0x12000, scoped, tag = 'internal scratch']
  %s0 = inlined_call_operand.vmem [shape: f32[196,1], index: 0, kind: input, shape index: {}]
  %s1 = inlined_call_operand.vmem [shape: bf16[784,196], index: 1, kind: input, shape index: {}]
  %s2 = inlined_call_operand.vmem [shape: f32[784,1], index: 2, kind: input, shape index: {}]
  %s3 = inlined_call_operand.vmem [shape: f32[784,49], index: 3, kind: input, shape index: {}]
  %s4 = inlined_call_operand.vmem [shape: f32[784,49], index: 4, kind: output, shape index: {}]
  %s5 = sld [smem:[#allocation0]]
  $region26: #{se_module_forward.1} parent=0
    _
  %s7 = ssub.s32 1, %s5
  %s8 = scalar_select 0, %s7, %s5
  // Predicated region
  $region2: #{se_module_forward.1} parent=0 // pred_check
    _
  $region3: #{se_module_forward.1} parent=0 // pred_check_branch
    %10 = sbr.rel (0) target = $region5
  $region4: #{se_module_forward.1} parent=0 // pred_region
    _
  $region5: #{se_module_forward.1} parent=0 // pred_fallthru
    _
  // Predicated region
  $region6: #{se_module_forward.1} parent=0 // pred_check
    _
  $region7: #{se_module_forward.1} parent=0 // pred_check_branch
    %12 = sbr.rel (0) target = $region9
  $region8: #{se_module_forward.1} parent=0 // pred_region
    _
  $region9: #{se_module_forward.1} parent=0 // pred_fallthru
    _
  // Predicated region
  $region10: #{se_module_forward.1} parent=0 // pred_check
    _
  $region11: #{se_module_forward.1} parent=0 // pred_check_branch
    %14 = sbr.rel (0) target = $region13
  $region12: #{se_module_forward.1} parent=0 // pred_region
    _
  $region13: #{se_module_forward.1} parent=0 // pred_fallthru
    _
  // Predicated region
  $region14: #{se_module_forward.1} parent=0 // pred_check
    _
  $region15: #{se_module_forward.1} parent=0 // pred_check_branch
    %16 = sbr.rel (0) target = $region17
  $region16: #{se_module_forward.1} parent=0 // pred_region
    _
  $region17: #{se_module_forward.1} parent=0 // pred_fallthru
    _
  %v18 = vld [vmem:[%s0] sm:$0xff]
  %v19 = vld [vmem:[%s0 + $0x8] sm:$0xff]
  %v20 = vld [vmem:[%s0 + $0x10] sm:$0xff]
  %v21 = vld [vmem:[%s0 + $0x18] sm:$0xff]
  %v22 = vld [vmem:[%s0 + $0x20] sm:$0xff]
  %v23 = vld [vmem:[%s0 + $0x28] sm:$0xff]
  %v24 = vld [vmem:[%s0 + $0x30] sm:$0xff]
  %v25 = vld [vmem:[%s0 + $0x38] sm:$0xff]
  %v26 = vld [vmem:[%s0 + $0x40] sm:$0xff]
  %v27 = vld [vmem:[%s0 + $0x48] sm:$0xff]
  %v28 = vld [vmem:[%s0 + $0x50] sm:$0xff]
  %v29 = vld [vmem:[%s0 + $0x58] sm:$0xff]
  %v30 = vld [vmem:[%s0 + $0x60] sm:$0xff]
  %v31 = vld [vmem:[%s0 + $0x68] sm:$0xff]
  %v32 = vld [vmem:[%s0 + $0x70] sm:$0xff]
  %v33 = vld [vmem:[%s0 + $0x78] sm:$0xff]
  %v34 = vld [vmem:[%s0 + $0x80] sm:$0xff]
  %v35 = vld [vmem:[%s0 + $0x88] sm:$0xff]
  %v36 = vld [vmem:[%s0 + $0x90] sm:$0xff]
  %v37 = vld [vmem:[%s0 + $0x98] sm:$0xff]
  %v38 = vld [vmem:[%s0 + $0xa0] sm:$0xff]
  %v39 = vld [vmem:[%s0 + $0xa8] sm:$0xff]
  %v40 = vld [vmem:[%s0 + $0xb0] sm:$0xff]
  %v41 = vld [vmem:[%s0 + $0xb8] sm:$0xff]
  %v42 = vld [vmem:[%s0 + $0xc0] sm:$0xf]
  %v43 = vmax.f32 %v18, 0.0
  %v44 = vmax.f32 %v19, 0.0
  %v45 = vmax.f32 %v20, 0.0
  %v46 = vmax.f32 %v21, 0.0
  %v47 = vmax.f32 %v22, 0.0
  %v48 = vmax.f32 %v23, 0.0
  %v49 = vmax.f32 %v24, 0.0
  %v50 = vmax.f32 %v25, 0.0
  %v51 = vmax.f32 %v26, 0.0
  %v52 = vmax.f32 %v27, 0.0
  %v53 = vmax.f32 %v28, 0.0
  %v54 = vmax.f32 %v29, 0.0
  %v55 = vmax.f32 %v30, 0.0
  %v56 = vmax.f32 %v31, 0.0
  %v57 = vmax.f32 %v32, 0.0
  %v58 = vmax.f32 %v33, 0.0
  %v59 = vmax.f32 %v34, 0.0
  %v60 = vmax.f32 %v35, 0.0
  %v61 = vmax.f32 %v36, 0.0
  %v62 = vmax.f32 %v37, 0.0
  %v63 = vmax.f32 %v38, 0.0
  %v64 = vmax.f32 %v39, 0.0
  %v65 = vmax.f32 %v40, 0.0
  %v66 = vmax.f32 %v41, 0.0
  %v67 = vmax.f32 %v42, 0.0
  %v68 = vpack.c.bf16 %v44, %v43
  %v69 = vpack.c.bf16 %v46, %v45
  %v70 = vpack.c.bf16 %v48, %v47
  %v71 = vpack.c.bf16 %v50, %v49
  %v72 = vpack.c.bf16 %v52, %v51
  %v73 = vpack.c.bf16 %v54, %v53
  %v74 = vpack.c.bf16 %v56, %v55
  %v75 = vpack.c.bf16 %v58, %v57
  %v76 = vpack.c.bf16 %v60, %v59
  %v77 = vpack.c.bf16 %v62, %v61
  %v78 = vpack.c.bf16 %v64, %v63
  %v79 = vpack.c.bf16 %v66, %v65
  %v80 = vpack.c.bf16 %v67, %v67
  %v81 = vld [vmem:[%s1] sm:$0xff]
  %v82 = vld [vmem:[%s1 + $0x8] sm:$0xff]
  %v83 = vld [vmem:[%s1 + $0x10] sm:$0xff]
  %v84 = vld [vmem:[%s1 + $0x18] sm:$0xff]
  %v85 = vld [vmem:[%s1 + $0x20] sm:$0xff]
  %v86 = vld [vmem:[%s1 + $0x28] sm:$0xff]
  %v87 = vld [vmem:[%s1 + $0x30] sm:$0xff]
  %v88 = vld [vmem:[%s1 + $0x38] sm:$0xff]
  %v89 = vld [vmem:[%s1 + $0x40] sm:$0xff]
  %v90 = vld [vmem:[%s1 + $0x48] sm:$0xff]
  %v91 = vld [vmem:[%s1 + $0x50] sm:$0xff]
  %v92 = vld [vmem:[%s1 + $0x58] sm:$0xff]
  %v93 = vld [vmem:[%s1 + $0x60] sm:$0xff]
  %v94 = vld [vmem:[%s1 + $0x68] sm:$0xff]
  %v95 = vld [vmem:[%s1 + $0x70] sm:$0xff]
  %v96 = vld [vmem:[%s1 + $0x78] sm:$0xff]
  %v97 = vld [vmem:[%s1 + $0x80] sm:$0xff]
  %v98 = vld [vmem:[%s1 + $0x88] sm:$0xff]
  %v99 = vld [vmem:[%s1 + $0x90] sm:$0xff]
  %v100 = vld [vmem:[%s1 + $0x98] sm:$0xff]
  %v101 = vld [vmem:[%s1 + $0xa0] sm:$0xff]
  %v102 = vld [vmem:[%s1 + $0xa8] sm:$0xff]
  %v103 = vld [vmem:[%s1 + $0xb0] sm:$0xff]
  %v104 = vld [vmem:[%s1 + $0xb8] sm:$0xff]
  %v105 = vld [vmem:[%s1 + $0xc0] sm:$0xff]
  %v106 = vld [vmem:[%s1 + $0xc8] sm:$0xff]
  %v107 = vld [vmem:[%s1 + $0xd0] sm:$0xff]
  %v108 = vld [vmem:[%s1 + $0xd8] sm:$0xff]
  %v109 = vld [vmem:[%s1 + $0xe0] sm:$0xff]
  %v110 = vld [vmem:[%s1 + $0xe8] sm:$0xff]
  %v111 = vld [vmem:[%s1 + $0xf0] sm:$0xff]
  %v112 = vld [vmem:[%s1 + $0xf8] sm:$0xff]
  %v113 = vld [vmem:[%s1 + $0x100] sm:$0xff]
  %v114 = vld [vmem:[%s1 + $0x108] sm:$0xff]
  %v115 = vld [vmem:[%s1 + $0x110] sm:$0xff]
  %v116 = vld [vmem:[%s1 + $0x118] sm:$0xff]
  %v117 = vld [vmem:[%s1 + $0x120] sm:$0xff]
  %v118 = vld [vmem:[%s1 + $0x128] sm:$0xff]
  %v119 = vld [vmem:[%s1 + $0x130] sm:$0xff]
  %v120 = vld [vmem:[%s1 + $0x138] sm:$0xff]
  %v121 = vld [vmem:[%s1 + $0x140] sm:$0xff]
  %v122 = vld [vmem:[%s1 + $0x148] sm:$0xff]
  %v123 = vld [vmem:[%s1 + $0x150] sm:$0xff]
  %v124 = vld [vmem:[%s1 + $0x158] sm:$0xff]
  %v125 = vld [vmem:[%s1 + $0x160] sm:$0xff]
  %v126 = vld [vmem:[%s1 + $0x168] sm:$0xff]
  %v127 = vld [vmem:[%s1 + $0x170] sm:$0xff]
  %v128 = vld [vmem:[%s1 + $0x178] sm:$0xff]
  %v129 = vld [vmem:[%s1 + $0x180] sm:$0xff]
  %v130 = vld [vmem:[%s1 + $0x188] sm:$0xff]
  %v131 = vld [vmem:[%s1 + $0x190] sm:$0xff]
  %v132 = vld [vmem:[%s1 + $0x198] sm:$0xff]
  %v133 = vld [vmem:[%s1 + $0x1a0] sm:$0xff]
  %v134 = vld [vmem:[%s1 + $0x1a8] sm:$0xff]
  %v135 = vld [vmem:[%s1 + $0x1b0] sm:$0xff]
  %v136 = vld [vmem:[%s1 + $0x1b8] sm:$0xff]
  %v137 = vld [vmem:[%s1 + $0x1c0] sm:$0xff]
  %v138 = vld [vmem:[%s1 + $0x1c8] sm:$0xff]
  %v139 = vld [vmem:[%s1 + $0x1d0] sm:$0xff]
  %v140 = vld [vmem:[%s1 + $0x1d8] sm:$0xff]
  %v141 = vld [vmem:[%s1 + $0x1e0] sm:$0xff]
  %v142 = vld [vmem:[%s1 + $0x1e8] sm:$0xff]
  %v143 = vld [vmem:[%s1 + $0x1f0] sm:$0xff]
  %v144 = vld [vmem:[%s1 + $0x1f8] sm:$0xff]
  %v145 = vld [vmem:[%s1 + $0x200] sm:$0xff]
  %v146 = vld [vmem:[%s1 + $0x208] sm:$0xff]
  %v147 = vld [vmem:[%s1 + $0x210] sm:$0xff]
  %v148 = vld [vmem:[%s1 + $0x218] sm:$0xff]
  %v149 = vld [vmem:[%s1 + $0x220] sm:$0xff]
  %v150 = vld [vmem:[%s1 + $0x228] sm:$0xff]
  %v151 = vld [vmem:[%s1 + $0x230] sm:$0xff]
  %v152 = vld [vmem:[%s1 + $0x238] sm:$0xff]
  %v153 = vld [vmem:[%s1 + $0x240] sm:$0xff]
  %v154 = vld [vmem:[%s1 + $0x248] sm:$0xff]
  %v155 = vld [vmem:[%s1 + $0x250] sm:$0xff]
  %v156 = vld [vmem:[%s1 + $0x258] sm:$0xff]
  %v157 = vld [vmem:[%s1 + $0x260] sm:$0xff]
  %v158 = vld [vmem:[%s1 + $0x268] sm:$0xff]
  %v159 = vld [vmem:[%s1 + $0x270] sm:$0xff]
  %v160 = vld [vmem:[%s1 + $0x278] sm:$0xff]
  %v161 = vld [vmem:[%s1 + $0x280] sm:$0xff]
  %v162 = vld [vmem:[%s1 + $0x288] sm:$0xff]
  %v163 = vld [vmem:[%s1 + $0x290] sm:$0xff]
  %v164 = vld [vmem:[%s1 + $0x298] sm:$0xff]
  %v165 = vld [vmem:[%s1 + $0x2a0] sm:$0xff]
  %v166 = vld [vmem:[%s1 + $0x2a8] sm:$0xff]
  %v167 = vld [vmem:[%s1 + $0x2b0] sm:$0xff]
  %v168 = vld [vmem:[%s1 + $0x2b8] sm:$0xff]
  %v169 = vld [vmem:[%s1 + $0x2c0] sm:$0xff]
  %v170 = vld [vmem:[%s1 + $0x2c8] sm:$0xff]
  %v171 = vld [vmem:[%s1 + $0x2d0] sm:$0xff]
  %v172 = vld [vmem:[%s1 + $0x2d8] sm:$0xff]
  %v173 = vld [vmem:[%s1 + $0x2e0] sm:$0xff]
  %v174 = vld [vmem:[%s1 + $0x2e8] sm:$0xff]
  %v175 = vld [vmem:[%s1 + $0x2f0] sm:$0xff]
  %v176 = vld [vmem:[%s1 + $0x2f8] sm:$0xff]
  %v177 = vld [vmem:[%s1 + $0x300] sm:$0xff]
  %v178 = vld [vmem:[%s1 + $0x308] sm:$0xff]
  %v179 = vld [vmem:[%s2] sm:$0xff]
  %v180 = vld [vmem:[%s2 + $0x8] sm:$0xff]
  %v181 = vld [vmem:[%s2 + $0x10] sm:$0xff]
  %v182 = vld [vmem:[%s2 + $0x18] sm:$0xff]
  %v183 = vld [vmem:[%s2 + $0x20] sm:$0xff]
  %v184 = vld [vmem:[%s2 + $0x28] sm:$0xff]
  %v185 = vld [vmem:[%s2 + $0x30] sm:$0xff]
  %v186 = vld [vmem:[%s2 + $0x38] sm:$0xff]
  %v187 = vld [vmem:[%s2 + $0x40] sm:$0xff]
  %v188 = vld [vmem:[%s2 + $0x48] sm:$0xff]
  %v189 = vld [vmem:[%s2 + $0x50] sm:$0xff]
  %v190 = vld [vmem:[%s2 + $0x58] sm:$0xff]
  %v191 = vld [vmem:[%s2 + $0x60] sm:$0xff]
  %v192 = vld [vmem:[%s2 + $0x68] sm:$0xff]
  %v193 = vld [vmem:[%s2 + $0x70] sm:$0xff]
  %v194 = vld [vmem:[%s2 + $0x78] sm:$0xff]
  %v195 = vld [vmem:[%s2 + $0x80] sm:$0xff]
  %v196 = vld [vmem:[%s2 + $0x88] sm:$0xff]
  %v197 = vld [vmem:[%s2 + $0x90] sm:$0xff]
  %v198 = vld [vmem:[%s2 + $0x98] sm:$0xff]
  %v199 = vld [vmem:[%s2 + $0xa0] sm:$0xff]
  %v200 = vld [vmem:[%s2 + $0xa8] sm:$0xff]
  %v201 = vld [vmem:[%s2 + $0xb0] sm:$0xff]
  %v202 = vld [vmem:[%s2 + $0xb8] sm:$0xff]
  %v203 = vld [vmem:[%s2 + $0xc0] sm:$0xff]
  %v204 = vld [vmem:[%s2 + $0xc8] sm:$0xff]
  %v205 = vld [vmem:[%s2 + $0xd0] sm:$0xff]
  %v206 = vld [vmem:[%s2 + $0xd8] sm:$0xff]
  %v207 = vld [vmem:[%s2 + $0xe0] sm:$0xff]
  %v208 = vld [vmem:[%s2 + $0xe8] sm:$0xff]
  %v209 = vld [vmem:[%s2 + $0xf0] sm:$0xff]
  %v210 = vld [vmem:[%s2 + $0xf8] sm:$0xff]
  %v211 = vld [vmem:[%s2 + $0x100] sm:$0xff]
  %v212 = vld [vmem:[%s2 + $0x108] sm:$0xff]
  %v213 = vld [vmem:[%s2 + $0x110] sm:$0xff]
  %v214 = vld [vmem:[%s2 + $0x118] sm:$0xff]
  %v215 = vld [vmem:[%s2 + $0x120] sm:$0xff]
  %v216 = vld [vmem:[%s2 + $0x128] sm:$0xff]
  %v217 = vld [vmem:[%s2 + $0x130] sm:$0xff]
  %v218 = vld [vmem:[%s2 + $0x138] sm:$0xff]
  %v219 = vld [vmem:[%s2 + $0x140] sm:$0xff]
  %v220 = vld [vmem:[%s2 + $0x148] sm:$0xff]
  %v221 = vld [vmem:[%s2 + $0x150] sm:$0xff]
  %v222 = vld [vmem:[%s2 + $0x158] sm:$0xff]
  %v223 = vld [vmem:[%s2 + $0x160] sm:$0xff]
  %v224 = vld [vmem:[%s2 + $0x168] sm:$0xff]
  %v225 = vld [vmem:[%s2 + $0x170] sm:$0xff]
  %v226 = vld [vmem:[%s2 + $0x178] sm:$0xff]
  %v227 = vld [vmem:[%s2 + $0x180] sm:$0xff]
  %v228 = vld [vmem:[%s2 + $0x188] sm:$0xff]
  %v229 = vld [vmem:[%s2 + $0x190] sm:$0xff]
  %v230 = vld [vmem:[%s2 + $0x198] sm:$0xff]
  %v231 = vld [vmem:[%s2 + $0x1a0] sm:$0xff]
  %v232 = vld [vmem:[%s2 + $0x1a8] sm:$0xff]
  %v233 = vld [vmem:[%s2 + $0x1b0] sm:$0xff]
  %v234 = vld [vmem:[%s2 + $0x1b8] sm:$0xff]
  %v235 = vld [vmem:[%s2 + $0x1c0] sm:$0xff]
  %v236 = vld [vmem:[%s2 + $0x1c8] sm:$0xff]
  %v237 = vld [vmem:[%s2 + $0x1d0] sm:$0xff]
  %v238 = vld [vmem:[%s2 + $0x1d8] sm:$0xff]
  %v239 = vld [vmem:[%s2 + $0x1e0] sm:$0xff]
  %v240 = vld [vmem:[%s2 + $0x1e8] sm:$0xff]
  %v241 = vld [vmem:[%s2 + $0x1f0] sm:$0xff]
  %v242 = vld [vmem:[%s2 + $0x1f8] sm:$0xff]
  %v243 = vld [vmem:[%s2 + $0x200] sm:$0xff]
  %v244 = vld [vmem:[%s2 + $0x208] sm:$0xff]
  %v245 = vld [vmem:[%s2 + $0x210] sm:$0xff]
  %v246 = vld [vmem:[%s2 + $0x218] sm:$0xff]
  %v247 = vld [vmem:[%s2 + $0x220] sm:$0xff]
  %v248 = vld [vmem:[%s2 + $0x228] sm:$0xff]
  %v249 = vld [vmem:[%s2 + $0x230] sm:$0xff]
  %v250 = vld [vmem:[%s2 + $0x238] sm:$0xff]
  %v251 = vld [vmem:[%s2 + $0x240] sm:$0xff]
  %v252 = vld [vmem:[%s2 + $0x248] sm:$0xff]
  %v253 = vld [vmem:[%s2 + $0x250] sm:$0xff]
  %v254 = vld [vmem:[%s2 + $0x258] sm:$0xff]
  %v255 = vld [vmem:[%s2 + $0x260] sm:$0xff]
  %v256 = vld [vmem:[%s2 + $0x268] sm:$0xff]
  %v257 = vld [vmem:[%s2 + $0x270] sm:$0xff]
  %v258 = vld [vmem:[%s2 + $0x278] sm:$0xff]
  %v259 = vld [vmem:[%s2 + $0x280] sm:$0xff]
  %v260 = vld [vmem:[%s2 + $0x288] sm:$0xff]
  %v261 = vld [vmem:[%s2 + $0x290] sm:$0xff]
  %v262 = vld [vmem:[%s2 + $0x298] sm:$0xff]
  %v263 = vld [vmem:[%s2 + $0x2a0] sm:$0xff]
  %v264 = vld [vmem:[%s2 + $0x2a8] sm:$0xff]
  %v265 = vld [vmem:[%s2 + $0x2b0] sm:$0xff]
  %v266 = vld [vmem:[%s2 + $0x2b8] sm:$0xff]
  %v267 = vld [vmem:[%s2 + $0x2c0] sm:$0xff]
  %v268 = vld [vmem:[%s2 + $0x2c8] sm:$0xff]
  %v269 = vld [vmem:[%s2 + $0x2d0] sm:$0xff]
  %v270 = vld [vmem:[%s2 + $0x2d8] sm:$0xff]
  %v271 = vld [vmem:[%s2 + $0x2e0] sm:$0xff]
  %v272 = vld [vmem:[%s2 + $0x2e8] sm:$0xff]
  %v273 = vld [vmem:[%s2 + $0x2f0] sm:$0xff]
  %v274 = vld [vmem:[%s2 + $0x2f8] sm:$0xff]
  %v275 = vld [vmem:[%s2 + $0x300] sm:$0xff]
  %v276 = vld [vmem:[%s2 + $0x308] sm:$0xff]
  %v375 = vunpack.c.l.b16 %v81
  %v376 = vunpack.c.h.b16 %v81
  %v377 = vunpack.c.l.b16 %v82
  %v378 = vunpack.c.h.b16 %v82
  %v379 = vunpack.c.l.b16 %v83
  %v380 = vunpack.c.h.b16 %v83
  %v381 = vunpack.c.l.b16 %v84
  %v382 = vunpack.c.h.b16 %v84
  %v383 = vunpack.c.l.b16 %v85
  %v384 = vunpack.c.h.b16 %v85
  %v385 = vunpack.c.l.b16 %v86
  %v386 = vunpack.c.h.b16 %v86
  %v387 = vunpack.c.l.b16 %v87
  %v388 = vunpack.c.h.b16 %v87
  %v389 = vunpack.c.l.b16 %v88
  %v390 = vunpack.c.h.b16 %v88
  %v391 = vunpack.c.l.b16 %v89
  %v392 = vunpack.c.h.b16 %v89
  %v393 = vunpack.c.l.b16 %v90
  %v394 = vunpack.c.h.b16 %v90
  %v395 = vunpack.c.l.b16 %v91
  %v396 = vunpack.c.h.b16 %v91
  %v397 = vunpack.c.l.b16 %v92
  %v398 = vunpack.c.h.b16 %v92
  %v399 = vunpack.c.l.b16 %v93
  %v400 = vunpack.c.h.b16 %v93
  %v401 = vunpack.c.l.b16 %v94
  %v402 = vunpack.c.h.b16 %v94
  %v403 = vunpack.c.l.b16 %v95
  %v404 = vunpack.c.h.b16 %v95
  %v405 = vunpack.c.l.b16 %v96
  %v406 = vunpack.c.h.b16 %v96
  %v407 = vunpack.c.l.b16 %v97
  %v408 = vunpack.c.h.b16 %v97
  %v409 = vunpack.c.l.b16 %v98
  %v410 = vunpack.c.h.b16 %v98
  %v411 = vunpack.c.l.b16 %v99
  %v412 = vunpack.c.h.b16 %v99
  %v413 = vunpack.c.l.b16 %v100
  %v414 = vunpack.c.h.b16 %v100
  %v415 = vunpack.c.l.b16 %v101
  %v416 = vunpack.c.h.b16 %v101
  %v417 = vunpack.c.l.b16 %v102
  %v418 = vunpack.c.h.b16 %v102
  %v419 = vunpack.c.l.b16 %v103
  %v420 = vunpack.c.h.b16 %v103
  %v421 = vunpack.c.l.b16 %v104
  %v422 = vunpack.c.h.b16 %v104
  %v423 = vunpack.c.l.b16 %v105
  %v424 = vunpack.c.h.b16 %v105
  %v425 = vunpack.c.l.b16 %v106
  %v426 = vunpack.c.h.b16 %v106
  %v427 = vunpack.c.l.b16 %v107
  %v428 = vunpack.c.h.b16 %v107
  %v429 = vunpack.c.l.b16 %v108
  %v430 = vunpack.c.h.b16 %v108
  %v431 = vunpack.c.l.b16 %v109
  %v432 = vunpack.c.h.b16 %v109
  %v433 = vunpack.c.l.b16 %v110
  %v434 = vunpack.c.h.b16 %v110
  %v435 = vunpack.c.l.b16 %v111
  %v436 = vunpack.c.h.b16 %v111
  %v437 = vunpack.c.l.b16 %v112
  %v438 = vunpack.c.h.b16 %v112
  %v439 = vunpack.c.l.b16 %v113
  %v440 = vunpack.c.h.b16 %v113
  %v441 = vunpack.c.l.b16 %v114
  %v442 = vunpack.c.h.b16 %v114
  %v443 = vunpack.c.l.b16 %v115
  %v444 = vunpack.c.h.b16 %v115
  %v445 = vunpack.c.l.b16 %v116
  %v446 = vunpack.c.h.b16 %v116
  %v447 = vunpack.c.l.b16 %v117
  %v448 = vunpack.c.h.b16 %v117
  %v449 = vunpack.c.l.b16 %v118
  %v450 = vunpack.c.h.b16 %v118
  %v451 = vunpack.c.l.b16 %v119
  %v452 = vunpack.c.h.b16 %v119
  %v453 = vunpack.c.l.b16 %v120
  %v454 = vunpack.c.h.b16 %v120
  %v455 = vunpack.c.l.b16 %v121
  %v456 = vunpack.c.h.b16 %v121
  %v457 = vunpack.c.l.b16 %v122
  %v458 = vunpack.c.h.b16 %v122
  %v459 = vunpack.c.l.b16 %v123
  %v460 = vunpack.c.h.b16 %v123
  %v461 = vunpack.c.l.b16 %v124
  %v462 = vunpack.c.h.b16 %v124
  %v463 = vunpack.c.l.b16 %v125
  %v464 = vunpack.c.h.b16 %v125
  %v465 = vunpack.c.l.b16 %v126
  %v466 = vunpack.c.h.b16 %v126
  %v467 = vunpack.c.l.b16 %v127
  %v468 = vunpack.c.h.b16 %v127
  %v469 = vunpack.c.l.b16 %v128
  %v470 = vunpack.c.h.b16 %v128
  %v471 = vunpack.c.l.b16 %v129
  %v472 = vunpack.c.h.b16 %v129
  %v473 = vunpack.c.l.b16 %v130
  %v474 = vunpack.c.h.b16 %v130
  %v475 = vunpack.c.l.b16 %v131
  %v476 = vunpack.c.h.b16 %v131
  %v477 = vunpack.c.l.b16 %v132
  %v478 = vunpack.c.h.b16 %v132
  %v479 = vunpack.c.l.b16 %v133
  %v480 = vunpack.c.h.b16 %v133
  %v481 = vunpack.c.l.b16 %v134
  %v482 = vunpack.c.h.b16 %v134
  %v483 = vunpack.c.l.b16 %v135
  %v484 = vunpack.c.h.b16 %v135
  %v485 = vunpack.c.l.b16 %v136
  %v486 = vunpack.c.h.b16 %v136
  %v487 = vunpack.c.l.b16 %v137
  %v488 = vunpack.c.h.b16 %v137
  %v489 = vunpack.c.l.b16 %v138
  %v490 = vunpack.c.h.b16 %v138
  %v491 = vunpack.c.l.b16 %v139
  %v492 = vunpack.c.h.b16 %v139
  %v493 = vunpack.c.l.b16 %v140
  %v494 = vunpack.c.h.b16 %v140
  %v495 = vunpack.c.l.b16 %v141
  %v496 = vunpack.c.h.b16 %v141
  %v497 = vunpack.c.l.b16 %v142
  %v498 = vunpack.c.h.b16 %v142
  %v499 = vunpack.c.l.b16 %v143
  %v500 = vunpack.c.h.b16 %v143
  %v501 = vunpack.c.l.b16 %v144
  %v502 = vunpack.c.h.b16 %v144
  %v503 = vunpack.c.l.b16 %v145
  %v504 = vunpack.c.h.b16 %v145
  %v505 = vunpack.c.l.b16 %v146
  %v506 = vunpack.c.h.b16 %v146
  %v507 = vunpack.c.l.b16 %v147
  %v508 = vunpack.c.h.b16 %v147
  %v509 = vunpack.c.l.b16 %v148
  %v510 = vunpack.c.h.b16 %v148
  %v511 = vunpack.c.l.b16 %v149
  %v512 = vunpack.c.h.b16 %v149
  %v513 = vunpack.c.l.b16 %v150
  %v514 = vunpack.c.h.b16 %v150
  %v515 = vunpack.c.l.b16 %v151
  %v516 = vunpack.c.h.b16 %v151
  %v517 = vunpack.c.l.b16 %v152
  %v518 = vunpack.c.h.b16 %v152
  %v519 = vunpack.c.l.b16 %v153
  %v520 = vunpack.c.h.b16 %v153
  %v521 = vunpack.c.l.b16 %v154
  %v522 = vunpack.c.h.b16 %v154
  %v523 = vunpack.c.l.b16 %v155
  %v524 = vunpack.c.h.b16 %v155
  %v525 = vunpack.c.l.b16 %v156
  %v526 = vunpack.c.h.b16 %v156
  %v527 = vunpack.c.l.b16 %v157
  %v528 = vunpack.c.h.b16 %v157
  %v529 = vunpack.c.l.b16 %v158
  %v530 = vunpack.c.h.b16 %v158
  %v531 = vunpack.c.l.b16 %v159
  %v532 = vunpack.c.h.b16 %v159
  %v533 = vunpack.c.l.b16 %v160
  %v534 = vunpack.c.h.b16 %v160
  %v535 = vunpack.c.l.b16 %v161
  %v536 = vunpack.c.h.b16 %v161
  %v537 = vunpack.c.l.b16 %v162
  %v538 = vunpack.c.h.b16 %v162
  %v539 = vunpack.c.l.b16 %v163
  %v540 = vunpack.c.h.b16 %v163
  %v541 = vunpack.c.l.b16 %v164
  %v542 = vunpack.c.h.b16 %v164
  %v543 = vunpack.c.l.b16 %v165
  %v544 = vunpack.c.h.b16 %v165
  %v545 = vunpack.c.l.b16 %v166
  %v546 = vunpack.c.h.b16 %v166
  %v547 = vunpack.c.l.b16 %v167
  %v548 = vunpack.c.h.b16 %v167
  %v549 = vunpack.c.l.b16 %v168
  %v550 = vunpack.c.h.b16 %v168
  %v551 = vunpack.c.l.b16 %v169
  %v552 = vunpack.c.h.b16 %v169
  %v553 = vunpack.c.l.b16 %v170
  %v554 = vunpack.c.h.b16 %v170
  %v555 = vunpack.c.l.b16 %v171
  %v556 = vunpack.c.h.b16 %v171
  %v557 = vunpack.c.l.b16 %v172
  %v558 = vunpack.c.h.b16 %v172
  %v559 = vunpack.c.l.b16 %v173
  %v560 = vunpack.c.h.b16 %v173
  %v561 = vunpack.c.l.b16 %v174
  %v562 = vunpack.c.h.b16 %v174
  %v563 = vunpack.c.l.b16 %v175
  %v564 = vunpack.c.h.b16 %v175
  %v565 = vunpack.c.l.b16 %v176
  %v566 = vunpack.c.h.b16 %v176
  %v567 = vunpack.c.l.b16 %v177
  %v568 = vunpack.c.h.b16 %v177
  %v569 = vunpack.c.l.b16 %v178
  %v570 = vunpack.c.h.b16 %v178
  %v571 = vpack.c.b16 %v377, %v375
  %v572 = vpack.c.b16 %v378, %v376
  %v573 = vpack.c.b16 %v381, %v379
  %v574 = vpack.c.b16 %v382, %v380
  %v575 = vpack.c.b16 %v385, %v383
  %v576 = vpack.c.b16 %v386, %v384
  %v577 = vpack.c.b16 %v389, %v387
  %v578 = vpack.c.b16 %v390, %v388
  %v579 = vpack.c.b16 %v393, %v391
  %v580 = vpack.c.b16 %v394, %v392
  %v581 = vpack.c.b16 %v397, %v395
  %v582 = vpack.c.b16 %v398, %v396
  %v583 = vpack.c.b16 %v401, %v399
  %v584 = vpack.c.b16 %v402, %v400
  %v585 = vpack.c.b16 %v405, %v403
  %v586 = vpack.c.b16 %v406, %v404
  %v587 = vpack.c.b16 %v409, %v407
  %v588 = vpack.c.b16 %v410, %v408
  %v589 = vpack.c.b16 %v413, %v411
  %v590 = vpack.c.b16 %v414, %v412
  %v591 = vpack.c.b16 %v417, %v415
  %v592 = vpack.c.b16 %v418, %v416
  %v593 = vpack.c.b16 %v421, %v419
  %v594 = vpack.c.b16 %v422, %v420
  %v595 = vpack.c.b16 %v425, %v423
  %v596 = vpack.c.b16 %v426, %v424
  %v597 = vpack.c.b16 %v429, %v427
  %v598 = vpack.c.b16 %v430, %v428
  %v599 = vpack.c.b16 %v433, %v431
  %v600 = vpack.c.b16 %v434, %v432
  %v601 = vpack.c.b16 %v437, %v435
  %v602 = vpack.c.b16 %v438, %v436
  %v603 = vpack.c.b16 %v441, %v439
  %v604 = vpack.c.b16 %v442, %v440
  %v605 = vpack.c.b16 %v445, %v443
  %v606 = vpack.c.b16 %v446, %v444
  %v607 = vpack.c.b16 %v449, %v447
  %v608 = vpack.c.b16 %v450, %v448
  %v609 = vpack.c.b16 %v453, %v451
  %v610 = vpack.c.b16 %v454, %v452
  %v611 = vpack.c.b16 %v457, %v455
  %v612 = vpack.c.b16 %v458, %v456
  %v613 = vpack.c.b16 %v461, %v459
  %v614 = vpack.c.b16 %v462, %v460
  %v615 = vpack.c.b16 %v465, %v463
  %v616 = vpack.c.b16 %v466, %v464
  %v617 = vpack.c.b16 %v469, %v467
  %v618 = vpack.c.b16 %v470, %v468
  %v619 = vpack.c.b16 %v473, %v471
  %v620 = vpack.c.b16 %v474, %v472
  %v621 = vpack.c.b16 %v477, %v475
  %v622 = vpack.c.b16 %v478, %v476
  %v623 = vpack.c.b16 %v481, %v479
  %v624 = vpack.c.b16 %v482, %v480
  %v625 = vpack.c.b16 %v485, %v483
  %v626 = vpack.c.b16 %v486, %v484
  %v627 = vpack.c.b16 %v489, %v487
  %v628 = vpack.c.b16 %v490, %v488
  %v629 = vpack.c.b16 %v493, %v491
  %v630 = vpack.c.b16 %v494, %v492
  %v631 = vpack.c.b16 %v497, %v495
  %v632 = vpack.c.b16 %v498, %v496
  %v633 = vpack.c.b16 %v501, %v499
  %v634 = vpack.c.b16 %v502, %v500
  %v635 = vpack.c.b16 %v505, %v503
  %v636 = vpack.c.b16 %v506, %v504
  %v637 = vpack.c.b16 %v509, %v507
  %v638 = vpack.c.b16 %v510, %v508
  %v639 = vpack.c.b16 %v513, %v511
  %v640 = vpack.c.b16 %v514, %v512
  %v641 = vpack.c.b16 %v517, %v515
  %v642 = vpack.c.b16 %v518, %v516
  %v643 = vpack.c.b16 %v521, %v519
  %v644 = vpack.c.b16 %v522, %v520
  %v645 = vpack.c.b16 %v525, %v523
  %v646 = vpack.c.b16 %v526, %v524
  %v647 = vpack.c.b16 %v529, %v527
  %v648 = vpack.c.b16 %v530, %v528
  %v649 = vpack.c.b16 %v533, %v531
  %v650 = vpack.c.b16 %v534, %v532
  %v651 = vpack.c.b16 %v537, %v535
  %v652 = vpack.c.b16 %v538, %v536
  %v653 = vpack.c.b16 %v541, %v539
  %v654 = vpack.c.b16 %v542, %v540
  %v655 = vpack.c.b16 %v545, %v543
  %v656 = vpack.c.b16 %v546, %v544
  %v657 = vpack.c.b16 %v549, %v547
  %v658 = vpack.c.b16 %v550, %v548
  %v659 = vpack.c.b16 %v553, %v551
  %v660 = vpack.c.b16 %v554, %v552
  %v661 = vpack.c.b16 %v557, %v555
  %v662 = vpack.c.b16 %v558, %v556
  %v663 = vpack.c.b16 %v561, %v559
  %v664 = vpack.c.b16 %v562, %v560
  %v665 = vpack.c.b16 %v565, %v563
  %v666 = vpack.c.b16 %v566, %v564
  %v667 = vpack.c.b16 %v569, %v567
  %v668 = vpack.c.b16 %v570, %v568
  %vm718 = vcmask 556032
  %v720 = vsel %vm718, %v572, 0
  %v723 = vsel %vm718, %v574, 0
  %v726 = vsel %vm718, %v576, 0
  %v729 = vsel %vm718, %v578, 0
  %v732 = vsel %vm718, %v580, 0
  %v735 = vsel %vm718, %v582, 0
  %v738 = vsel %vm718, %v584, 0
  %v741 = vsel %vm718, %v586, 0
  %v744 = vsel %vm718, %v588, 0
  %v747 = vsel %vm718, %v590, 0
  %v750 = vsel %vm718, %v592, 0
  %v753 = vsel %vm718, %v594, 0
  %v756 = vsel %vm718, %v596, 0
  %v759 = vsel %vm718, %v598, 0
  %v762 = vsel %vm718, %v600, 0
  %v765 = vsel %vm718, %v602, 0
  %v768 = vsel %vm718, %v604, 0
  %v771 = vsel %vm718, %v606, 0
  %v774 = vsel %vm718, %v608, 0
  %v777 = vsel %vm718, %v610, 0
  %v780 = vsel %vm718, %v612, 0
  %v783 = vsel %vm718, %v614, 0
  %v786 = vsel %vm718, %v616, 0
  %v789 = vsel %vm718, %v618, 0
  %v792 = vsel %vm718, %v620, 0
  %v795 = vsel %vm718, %v622, 0
  %v798 = vsel %vm718, %v624, 0
  %v801 = vsel %vm718, %v626, 0
  %v804 = vsel %vm718, %v628, 0
  %v807 = vsel %vm718, %v630, 0
  %v810 = vsel %vm718, %v632, 0
  %v813 = vsel %vm718, %v634, 0
  %v816 = vsel %vm718, %v636, 0
  %v819 = vsel %vm718, %v638, 0
  %v822 = vsel %vm718, %v640, 0
  %v825 = vsel %vm718, %v642, 0
  %v828 = vsel %vm718, %v644, 0
  %v831 = vsel %vm718, %v646, 0
  %v834 = vsel %vm718, %v648, 0
  %v837 = vsel %vm718, %v650, 0
  %v840 = vsel %vm718, %v652, 0
  %v843 = vsel %vm718, %v654, 0
  %v846 = vsel %vm718, %v656, 0
  %v849 = vsel %vm718, %v658, 0
  %v852 = vsel %vm718, %v660, 0
  %v855 = vsel %vm718, %v662, 0
  %v858 = vsel %vm718, %v664, 0
  %v861 = vsel %vm718, %v666, 0
  %v864 = vsel %vm718, %v668, 0
  %vm866 = vcmask 1041408
  %v868 = vsel %vm866, %v80, 0
  %870 = vmatprep.subr.bf16.mxu0 0
  %871 = vmatpush1.bf16.msra.mxu0 %v75
  %872 = vmatprep.subr.bf16.mxu0 0
  %873 = vmatpush1.bf16.msra.mxu0 %v74
  %874 = vmatprep.subr.bf16.mxu0 0
  %875 = vmatpush1.bf16.msra.mxu0 %v73
  %876 = vmatprep.subr.bf16.mxu0 0
  %877 = vmatpush1.bf16.msra.mxu0 %v72
  %878 = vmatprep.subr.bf16.mxu0 0
  %879 = vmatpush1.bf16.msra.mxu0 %v71
  %880 = vmatprep.subr.bf16.mxu0 0
  %881 = vmatpush1.bf16.msra.mxu0 %v70
  %882 = vmatprep.subr.bf16.mxu0 0
  %883 = vmatpush1.bf16.msra.mxu0 %v69
  %884 = vmatprep.subr.bf16.mxu0 0
  %885 = vmatpush1.bf16.msra.mxu0 %v68
  %886 = vmatprep.subr.bf16.mxu0 0
  %887 = vmatpush2.bf16.msra.mxu0 0
  %888 = vmatprep.subr.bf16.mxu0 0
  %889 = vmatpush2.bf16.msra.mxu0 0
  %890 = vmatprep.subr.bf16.mxu0 0
  %891 = vmatpush2.bf16.msra.mxu0 0
  %892 = vmatprep.subr.bf16.mxu0 0
  %893 = vmatpush2.bf16.msra.mxu0 %v868
  %894 = vmatprep.subr.bf16.mxu0 0
  %895 = vmatpush2.bf16.msra.mxu0 %v79
  %896 = vmatprep.subr.bf16.mxu0 0
  %897 = vmatpush2.bf16.msra.mxu0 %v78
  %898 = vmatprep.subr.bf16.mxu0 0
  %899 = vmatpush2.bf16.msra.mxu0 %v77
  %900 = vmatprep.subr.bf16.mxu0 0
  %901 = vmatpush2.bf16.msra.mxu0 %v76
  %902 = vmatprep.mubr.bf16.mxu0 %v720
  %903 = vmatmul.mubr.bf16.gmra.mxu0 %v571
  %v904 = vpop.f32.mrf.mxu0
  %v905 = vadd.f32 %v179, %v904
  %v906 = vpop.f32.mrf.mxu0
  %v907 = vpop.f32.mrf.mxu0
  %v908 = vadd.f32 %v180, %v907
  %v909 = vpop.f32.mrf.mxu0
  %910 = vmatprep.mubr.bf16.mxu0 %v723
  %911 = vmatmul.mubr.bf16.gmra.mxu0 %v573
  %v912 = vpop.f32.mrf.mxu0
  %v913 = vadd.f32 %v181, %v912
  %v914 = vpop.f32.mrf.mxu0
  %v915 = vpop.f32.mrf.mxu0
  %v916 = vadd.f32 %v182, %v915
  %v917 = vpop.f32.mrf.mxu0
  %918 = vmatprep.mubr.bf16.mxu0 %v726
  %919 = vmatmul.mubr.bf16.gmra.mxu0 %v575
  %v920 = vpop.f32.mrf.mxu0
  %v921 = vadd.f32 %v183, %v920
  %v922 = vpop.f32.mrf.mxu0
  %v923 = vpop.f32.mrf.mxu0
  %v924 = vadd.f32 %v184, %v923
  %v925 = vpop.f32.mrf.mxu0
  %926 = vmatprep.mubr.bf16.mxu0 %v729
  %927 = vmatmul.mubr.bf16.gmra.mxu0 %v577
  %v928 = vpop.f32.mrf.mxu0
  %v929 = vadd.f32 %v185, %v928
  %v930 = vpop.f32.mrf.mxu0
  %v931 = vpop.f32.mrf.mxu0
  %v932 = vadd.f32 %v186, %v931
  %v933 = vpop.f32.mrf.mxu0
  %934 = vmatprep.mubr.bf16.mxu0 %v732
  %935 = vmatmul.mubr.bf16.gmra.mxu0 %v579
  %v936 = vpop.f32.mrf.mxu0
  %v937 = vadd.f32 %v187, %v936
  %v938 = vpop.f32.mrf.mxu0
  %v939 = vpop.f32.mrf.mxu0
  %v940 = vadd.f32 %v188, %v939
  %v941 = vpop.f32.mrf.mxu0
  %942 = vmatprep.mubr.bf16.mxu0 %v735
  %943 = vmatmul.mubr.bf16.gmra.mxu0 %v581
  %v944 = vpop.f32.mrf.mxu0
  %v945 = vadd.f32 %v189, %v944
  %v946 = vpop.f32.mrf.mxu0
  %v947 = vpop.f32.mrf.mxu0
  %v948 = vadd.f32 %v190, %v947
  %v949 = vpop.f32.mrf.mxu0
  %950 = vmatprep.mubr.bf16.mxu0 %v738
  %951 = vmatmul.mubr.bf16.gmra.mxu0 %v583
  %v952 = vpop.f32.mrf.mxu0
  %v953 = vadd.f32 %v191, %v952
  %v954 = vpop.f32.mrf.mxu0
  %v955 = vpop.f32.mrf.mxu0
  %v956 = vadd.f32 %v192, %v955
  %v957 = vpop.f32.mrf.mxu0
  %958 = vmatprep.mubr.bf16.mxu0 %v741
  %959 = vmatmul.mubr.bf16.gmra.mxu0 %v585
  %v960 = vpop.f32.mrf.mxu0
  %v961 = vadd.f32 %v193, %v960
  %v962 = vpop.f32.mrf.mxu0
  %v963 = vpop.f32.mrf.mxu0
  %v964 = vadd.f32 %v194, %v963
  %v965 = vpop.f32.mrf.mxu0
  %966 = vmatprep.mubr.bf16.mxu0 %v744
  %967 = vmatmul.mubr.bf16.gmra.mxu0 %v587
  %v968 = vpop.f32.mrf.mxu0
  %v969 = vadd.f32 %v195, %v968
  %v970 = vpop.f32.mrf.mxu0
  %v971 = vpop.f32.mrf.mxu0
  %v972 = vadd.f32 %v196, %v971
  %v973 = vpop.f32.mrf.mxu0
  %974 = vmatprep.mubr.bf16.mxu0 %v747
  %975 = vmatmul.mubr.bf16.gmra.mxu0 %v589
  %v976 = vpop.f32.mrf.mxu0
  %v977 = vadd.f32 %v197, %v976
  %v978 = vpop.f32.mrf.mxu0
  %v979 = vpop.f32.mrf.mxu0
  %v980 = vadd.f32 %v198, %v979
  %v981 = vpop.f32.mrf.mxu0
  %982 = vmatprep.mubr.bf16.mxu0 %v750
  %983 = vmatmul.mubr.bf16.gmra.mxu0 %v591
  %v984 = vpop.f32.mrf.mxu0
  %v985 = vadd.f32 %v199, %v984
  %v986 = vpop.f32.mrf.mxu0
  %v987 = vpop.f32.mrf.mxu0
  %v988 = vadd.f32 %v200, %v987
  %v989 = vpop.f32.mrf.mxu0
  %990 = vmatprep.mubr.bf16.mxu0 %v753
  %991 = vmatmul.mubr.bf16.gmra.mxu0 %v593
  %v992 = vpop.f32.mrf.mxu0
  %v993 = vadd.f32 %v201, %v992
  %v994 = vpop.f32.mrf.mxu0
  %v995 = vpop.f32.mrf.mxu0
  %v996 = vadd.f32 %v202, %v995
  %v997 = vpop.f32.mrf.mxu0
  %998 = vmatprep.mubr.bf16.mxu0 %v756
  %999 = vmatmul.mubr.bf16.gmra.mxu0 %v595
  %v1000 = vpop.f32.mrf.mxu0
  %v1001 = vadd.f32 %v203, %v1000
  %v1002 = vpop.f32.mrf.mxu0
  %v1003 = vpop.f32.mrf.mxu0
  %v1004 = vadd.f32 %v204, %v1003
  %v1005 = vpop.f32.mrf.mxu0
  %1006 = vmatprep.mubr.bf16.mxu0 %v759
  %1007 = vmatmul.mubr.bf16.gmra.mxu0 %v597
  %v1008 = vpop.f32.mrf.mxu0
  %v1009 = vadd.f32 %v205, %v1008
  %v1010 = vpop.f32.mrf.mxu0
  %v1011 = vpop.f32.mrf.mxu0
  %v1012 = vadd.f32 %v206, %v1011
  %v1013 = vpop.f32.mrf.mxu0
  %1014 = vmatprep.mubr.bf16.mxu0 %v762
  %1015 = vmatmul.mubr.bf16.gmra.mxu0 %v599
  %v1016 = vpop.f32.mrf.mxu0
  %v1017 = vadd.f32 %v207, %v1016
  %v1018 = vpop.f32.mrf.mxu0
  %v1019 = vpop.f32.mrf.mxu0
  %v1020 = vadd.f32 %v208, %v1019
  %v1021 = vpop.f32.mrf.mxu0
  %1022 = vmatprep.mubr.bf16.mxu0 %v765
  %1023 = vmatmul.mubr.bf16.gmra.mxu0 %v601
  %v1024 = vpop.f32.mrf.mxu0
  %v1025 = vadd.f32 %v209, %v1024
  %v1026 = vpop.f32.mrf.mxu0
  %v1027 = vpop.f32.mrf.mxu0
  %v1028 = vadd.f32 %v210, %v1027
  %v1029 = vpop.f32.mrf.mxu0
  %1030 = vmatprep.mubr.bf16.mxu0 %v768
  %1031 = vmatmul.mubr.bf16.gmra.mxu0 %v603
  %v1032 = vpop.f32.mrf.mxu0
  %v1033 = vadd.f32 %v211, %v1032
  %v1034 = vpop.f32.mrf.mxu0
  %v1035 = vpop.f32.mrf.mxu0
  %v1036 = vadd.f32 %v212, %v1035
  %v1037 = vpop.f32.mrf.mxu0
  %1038 = vmatprep.mubr.bf16.mxu0 %v771
  %1039 = vmatmul.mubr.bf16.gmra.mxu0 %v605
  %v1040 = vpop.f32.mrf.mxu0
  %v1041 = vadd.f32 %v213, %v1040
  %v1042 = vpop.f32.mrf.mxu0
  %v1043 = vpop.f32.mrf.mxu0
  %v1044 = vadd.f32 %v214, %v1043
  %v1045 = vpop.f32.mrf.mxu0
  %1046 = vmatprep.mubr.bf16.mxu0 %v774
  %1047 = vmatmul.mubr.bf16.gmra.mxu0 %v607
  %v1048 = vpop.f32.mrf.mxu0
  %v1049 = vadd.f32 %v215, %v1048
  %v1050 = vpop.f32.mrf.mxu0
  %v1051 = vpop.f32.mrf.mxu0
  %v1052 = vadd.f32 %v216, %v1051
  %v1053 = vpop.f32.mrf.mxu0
  %1054 = vmatprep.mubr.bf16.mxu0 %v777
  %1055 = vmatmul.mubr.bf16.gmra.mxu0 %v609
  %v1056 = vpop.f32.mrf.mxu0
  %v1057 = vadd.f32 %v217, %v1056
  %v1058 = vpop.f32.mrf.mxu0
  %v1059 = vpop.f32.mrf.mxu0
  %v1060 = vadd.f32 %v218, %v1059
  %v1061 = vpop.f32.mrf.mxu0
  %1062 = vmatprep.mubr.bf16.mxu0 %v780
  %1063 = vmatmul.mubr.bf16.gmra.mxu0 %v611
  %v1064 = vpop.f32.mrf.mxu0
  %v1065 = vadd.f32 %v219, %v1064
  %v1066 = vpop.f32.mrf.mxu0
  %v1067 = vpop.f32.mrf.mxu0
  %v1068 = vadd.f32 %v220, %v1067
  %v1069 = vpop.f32.mrf.mxu0
  %1070 = vmatprep.mubr.bf16.mxu0 %v783
  %1071 = vmatmul.mubr.bf16.gmra.mxu0 %v613
  %v1072 = vpop.f32.mrf.mxu0
  %v1073 = vadd.f32 %v221, %v1072
  %v1074 = vpop.f32.mrf.mxu0
  %v1075 = vpop.f32.mrf.mxu0
  %v1076 = vadd.f32 %v222, %v1075
  %v1077 = vpop.f32.mrf.mxu0
  %1078 = vmatprep.mubr.bf16.mxu0 %v786
  %1079 = vmatmul.mubr.bf16.gmra.mxu0 %v615
  %v1080 = vpop.f32.mrf.mxu0
  %v1081 = vadd.f32 %v223, %v1080
  %v1082 = vpop.f32.mrf.mxu0
  %v1083 = vpop.f32.mrf.mxu0
  %v1084 = vadd.f32 %v224, %v1083
  %v1085 = vpop.f32.mrf.mxu0
  %1086 = vmatprep.mubr.bf16.mxu0 %v789
  %1087 = vmatmul.mubr.bf16.gmra.mxu0 %v617
  %v1088 = vpop.f32.mrf.mxu0
  %v1089 = vadd.f32 %v225, %v1088
  %v1090 = vpop.f32.mrf.mxu0
  %v1091 = vpop.f32.mrf.mxu0
  %v1092 = vadd.f32 %v226, %v1091
  %v1093 = vpop.f32.mrf.mxu0
  %1094 = vmatprep.mubr.bf16.mxu0 %v792
  %1095 = vmatmul.mubr.bf16.gmra.mxu0 %v619
  %v1096 = vpop.f32.mrf.mxu0
  %v1097 = vadd.f32 %v227, %v1096
  %v1098 = vpop.f32.mrf.mxu0
  %v1099 = vpop.f32.mrf.mxu0
  %v1100 = vadd.f32 %v228, %v1099
  %v1101 = vpop.f32.mrf.mxu0
  %1102 = vmatprep.mubr.bf16.mxu0 %v795
  %1103 = vmatmul.mubr.bf16.gmra.mxu0 %v621
  %v1104 = vpop.f32.mrf.mxu0
  %v1105 = vadd.f32 %v229, %v1104
  %v1106 = vpop.f32.mrf.mxu0
  %v1107 = vpop.f32.mrf.mxu0
  %v1108 = vadd.f32 %v230, %v1107
  %v1109 = vpop.f32.mrf.mxu0
  %1110 = vmatprep.mubr.bf16.mxu0 %v798
  %1111 = vmatmul.mubr.bf16.gmra.mxu0 %v623
  %v1112 = vpop.f32.mrf.mxu0
  %v1113 = vadd.f32 %v231, %v1112
  %v1114 = vpop.f32.mrf.mxu0
  %v1115 = vpop.f32.mrf.mxu0
  %v1116 = vadd.f32 %v232, %v1115
  %v1117 = vpop.f32.mrf.mxu0
  %1118 = vmatprep.mubr.bf16.mxu0 %v801
  %1119 = vmatmul.mubr.bf16.gmra.mxu0 %v625
  %v1120 = vpop.f32.mrf.mxu0
  %v1121 = vadd.f32 %v233, %v1120
  %v1122 = vpop.f32.mrf.mxu0
  %v1123 = vpop.f32.mrf.mxu0
  %v1124 = vadd.f32 %v234, %v1123
  %v1125 = vpop.f32.mrf.mxu0
  %1126 = vmatprep.mubr.bf16.mxu0 %v804
  %1127 = vmatmul.mubr.bf16.gmra.mxu0 %v627
  %v1128 = vpop.f32.mrf.mxu0
  %v1129 = vadd.f32 %v235, %v1128
  %v1130 = vpop.f32.mrf.mxu0
  %v1131 = vpop.f32.mrf.mxu0
  %v1132 = vadd.f32 %v236, %v1131
  %v1133 = vpop.f32.mrf.mxu0
  %1134 = vmatprep.mubr.bf16.mxu0 %v807
  %1135 = vmatmul.mubr.bf16.gmra.mxu0 %v629
  %v1136 = vpop.f32.mrf.mxu0
  %v1137 = vadd.f32 %v237, %v1136
  %v1138 = vpop.f32.mrf.mxu0
  %v1139 = vpop.f32.mrf.mxu0
  %v1140 = vadd.f32 %v238, %v1139
  %v1141 = vpop.f32.mrf.mxu0
  %1142 = vmatprep.mubr.bf16.mxu0 %v810
  %1143 = vmatmul.mubr.bf16.gmra.mxu0 %v631
  %v1144 = vpop.f32.mrf.mxu0
  %v1145 = vadd.f32 %v239, %v1144
  %v1146 = vpop.f32.mrf.mxu0
  %v1147 = vpop.f32.mrf.mxu0
  %v1148 = vadd.f32 %v240, %v1147
  %v1149 = vpop.f32.mrf.mxu0
  %1150 = vmatprep.mubr.bf16.mxu0 %v813
  %1151 = vmatmul.mubr.bf16.gmra.mxu0 %v633
  %v1152 = vpop.f32.mrf.mxu0
  %v1153 = vadd.f32 %v241, %v1152
  %v1154 = vpop.f32.mrf.mxu0
  %v1155 = vpop.f32.mrf.mxu0
  %v1156 = vadd.f32 %v242, %v1155
  %v1157 = vpop.f32.mrf.mxu0
  %1158 = vmatprep.mubr.bf16.mxu0 %v816
  %1159 = vmatmul.mubr.bf16.gmra.mxu0 %v635
  %v1160 = vpop.f32.mrf.mxu0
  %v1161 = vadd.f32 %v243, %v1160
  %v1162 = vpop.f32.mrf.mxu0
  %v1163 = vpop.f32.mrf.mxu0
  %v1164 = vadd.f32 %v244, %v1163
  %v1165 = vpop.f32.mrf.mxu0
  %1166 = vmatprep.mubr.bf16.mxu0 %v819
  %1167 = vmatmul.mubr.bf16.gmra.mxu0 %v637
  %v1168 = vpop.f32.mrf.mxu0
  %v1169 = vadd.f32 %v245, %v1168
  %v1170 = vpop.f32.mrf.mxu0
  %v1171 = vpop.f32.mrf.mxu0
  %v1172 = vadd.f32 %v246, %v1171
  %v1173 = vpop.f32.mrf.mxu0
  %1174 = vmatprep.mubr.bf16.mxu0 %v822
  %1175 = vmatmul.mubr.bf16.gmra.mxu0 %v639
  %v1176 = vpop.f32.mrf.mxu0
  %v1177 = vadd.f32 %v247, %v1176
  %v1178 = vpop.f32.mrf.mxu0
  %v1179 = vpop.f32.mrf.mxu0
  %v1180 = vadd.f32 %v248, %v1179
  %v1181 = vpop.f32.mrf.mxu0
  %1182 = vmatprep.mubr.bf16.mxu0 %v825
  %1183 = vmatmul.mubr.bf16.gmra.mxu0 %v641
  %v1184 = vpop.f32.mrf.mxu0
  %v1185 = vadd.f32 %v249, %v1184
  %v1186 = vpop.f32.mrf.mxu0
  %v1187 = vpop.f32.mrf.mxu0
  %v1188 = vadd.f32 %v250, %v1187
  %v1189 = vpop.f32.mrf.mxu0
  %1190 = vmatprep.mubr.bf16.mxu0 %v828
  %1191 = vmatmul.mubr.bf16.gmra.mxu0 %v643
  %v1192 = vpop.f32.mrf.mxu0
  %v1193 = vadd.f32 %v251, %v1192
  %v1194 = vpop.f32.mrf.mxu0
  %v1195 = vpop.f32.mrf.mxu0
  %v1196 = vadd.f32 %v252, %v1195
  %v1197 = vpop.f32.mrf.mxu0
  %1198 = vmatprep.mubr.bf16.mxu0 %v831
  %1199 = vmatmul.mubr.bf16.gmra.mxu0 %v645
  %v1200 = vpop.f32.mrf.mxu0
  %v1201 = vadd.f32 %v253, %v1200
  %v1202 = vpop.f32.mrf.mxu0
  %v1203 = vpop.f32.mrf.mxu0
  %v1204 = vadd.f32 %v254, %v1203
  %v1205 = vpop.f32.mrf.mxu0
  %1206 = vmatprep.mubr.bf16.mxu0 %v834
  %1207 = vmatmul.mubr.bf16.gmra.mxu0 %v647
  %v1208 = vpop.f32.mrf.mxu0
  %v1209 = vadd.f32 %v255, %v1208
  %v1210 = vpop.f32.mrf.mxu0
  %v1211 = vpop.f32.mrf.mxu0
  %v1212 = vadd.f32 %v256, %v1211
  %v1213 = vpop.f32.mrf.mxu0
  %1214 = vmatprep.mubr.bf16.mxu0 %v837
  %1215 = vmatmul.mubr.bf16.gmra.mxu0 %v649
  %v1216 = vpop.f32.mrf.mxu0
  %v1217 = vadd.f32 %v257, %v1216
  %v1218 = vpop.f32.mrf.mxu0
  %v1219 = vpop.f32.mrf.mxu0
  %v1220 = vadd.f32 %v258, %v1219
  %v1221 = vpop.f32.mrf.mxu0
  %1222 = vmatprep.mubr.bf16.mxu0 %v840
  %1223 = vmatmul.mubr.bf16.gmra.mxu0 %v651
  %v1224 = vpop.f32.mrf.mxu0
  %v1225 = vadd.f32 %v259, %v1224
  %v1226 = vpop.f32.mrf.mxu0
  %v1227 = vpop.f32.mrf.mxu0
  %v1228 = vadd.f32 %v260, %v1227
  %v1229 = vpop.f32.mrf.mxu0
  %1230 = vmatprep.mubr.bf16.mxu0 %v843
  %1231 = vmatmul.mubr.bf16.gmra.mxu0 %v653
  %v1232 = vpop.f32.mrf.mxu0
  %v1233 = vadd.f32 %v261, %v1232
  %v1234 = vpop.f32.mrf.mxu0
  %v1235 = vpop.f32.mrf.mxu0
  %v1236 = vadd.f32 %v262, %v1235
  %v1237 = vpop.f32.mrf.mxu0
  %1238 = vmatprep.mubr.bf16.mxu0 %v846
  %1239 = vmatmul.mubr.bf16.gmra.mxu0 %v655
  %v1240 = vpop.f32.mrf.mxu0
  %v1241 = vadd.f32 %v263, %v1240
  %v1242 = vpop.f32.mrf.mxu0
  %v1243 = vpop.f32.mrf.mxu0
  %v1244 = vadd.f32 %v264, %v1243
  %v1245 = vpop.f32.mrf.mxu0
  %1246 = vmatprep.mubr.bf16.mxu0 %v849
  %1247 = vmatmul.mubr.bf16.gmra.mxu0 %v657
  %v1248 = vpop.f32.mrf.mxu0
  %v1249 = vadd.f32 %v265, %v1248
  %v1250 = vpop.f32.mrf.mxu0
  %v1251 = vpop.f32.mrf.mxu0
  %v1252 = vadd.f32 %v266, %v1251
  %v1253 = vpop.f32.mrf.mxu0
  %1254 = vmatprep.mubr.bf16.mxu0 %v852
  %1255 = vmatmul.mubr.bf16.gmra.mxu0 %v659
  %v1256 = vpop.f32.mrf.mxu0
  %v1257 = vadd.f32 %v267, %v1256
  %v1258 = vpop.f32.mrf.mxu0
  %v1259 = vpop.f32.mrf.mxu0
  %v1260 = vadd.f32 %v268, %v1259
  %v1261 = vpop.f32.mrf.mxu0
  %1262 = vmatprep.mubr.bf16.mxu0 %v855
  %1263 = vmatmul.mubr.bf16.gmra.mxu0 %v661
  %v1264 = vpop.f32.mrf.mxu0
  %v1265 = vadd.f32 %v269, %v1264
  %v1266 = vpop.f32.mrf.mxu0
  %v1267 = vpop.f32.mrf.mxu0
  %v1268 = vadd.f32 %v270, %v1267
  %v1269 = vpop.f32.mrf.mxu0
  %1270 = vmatprep.mubr.bf16.mxu0 %v858
  %1271 = vmatmul.mubr.bf16.gmra.mxu0 %v663
  %v1272 = vpop.f32.mrf.mxu0
  %v1273 = vadd.f32 %v271, %v1272
  %v1274 = vpop.f32.mrf.mxu0
  %v1275 = vpop.f32.mrf.mxu0
  %v1276 = vadd.f32 %v272, %v1275
  %v1277 = vpop.f32.mrf.mxu0
  %1278 = vmatprep.mubr.bf16.mxu0 %v861
  %1279 = vmatmul.mubr.bf16.gmra.mxu0 %v665
  %v1280 = vpop.f32.mrf.mxu0
  %v1281 = vadd.f32 %v273, %v1280
  %v1282 = vpop.f32.mrf.mxu0
  %v1283 = vpop.f32.mrf.mxu0
  %v1284 = vadd.f32 %v274, %v1283
  %v1285 = vpop.f32.mrf.mxu0
  %1286 = vmatprep.mubr.bf16.mxu0 %v864
  %1287 = vmatmul.mubr.bf16.gmra.mxu0 %v667
  %v1288 = vpop.f32.mrf.mxu0
  %v1289 = vadd.f32 %v275, %v1288
  %v1290 = vpop.f32.mrf.mxu0
  %v1291 = vpop.f32.mrf.mxu0
  %v1292 = vadd.f32 %v276, %v1291
  %v1293 = vpop.f32.mrf.mxu0
  %1294 = vdwg.mxu0
  %v1295 = vxor.u32 %v905, 2147483648
  %v1296 = vxor.u32 %v908, 2147483648
  %v1297 = vxor.u32 %v913, 2147483648
  %v1298 = vxor.u32 %v916, 2147483648
  %v1299 = vxor.u32 %v921, 2147483648
  %v1300 = vxor.u32 %v924, 2147483648
  %v1301 = vxor.u32 %v929, 2147483648
  %v1302 = vxor.u32 %v932, 2147483648
  %v1303 = vxor.u32 %v937, 2147483648
  %v1304 = vxor.u32 %v940, 2147483648
  %v1305 = vxor.u32 %v945, 2147483648
  %v1306 = vxor.u32 %v948, 2147483648
  %v1307 = vxor.u32 %v953, 2147483648
  %v1308 = vxor.u32 %v956, 2147483648
  %v1309 = vxor.u32 %v961, 2147483648
  %v1310 = vxor.u32 %v964, 2147483648
  %v1311 = vxor.u32 %v969, 2147483648
  %v1312 = vxor.u32 %v972, 2147483648
  %v1313 = vxor.u32 %v977, 2147483648
  %v1314 = vxor.u32 %v980, 2147483648
  %v1315 = vxor.u32 %v985, 2147483648
  %v1316 = vxor.u32 %v988, 2147483648
  %v1317 = vxor.u32 %v993, 2147483648
  %v1318 = vxor.u32 %v996, 2147483648
  %v1319 = vxor.u32 %v1001, 2147483648
  %v1320 = vxor.u32 %v1004, 2147483648
  %v1321 = vxor.u32 %v1009, 2147483648
  %v1322 = vxor.u32 %v1012, 2147483648
  %v1323 = vxor.u32 %v1017, 2147483648
  %v1324 = vxor.u32 %v1020, 2147483648
  %v1325 = vxor.u32 %v1025, 2147483648
  %v1326 = vxor.u32 %v1028, 2147483648
  %v1327 = vxor.u32 %v1033, 2147483648
  %v1328 = vxor.u32 %v1036, 2147483648
  %v1329 = vxor.u32 %v1041, 2147483648
  %v1330 = vxor.u32 %v1044, 2147483648
  %v1331 = vxor.u32 %v1049, 2147483648
  %v1332 = vxor.u32 %v1052, 2147483648
  %v1333 = vxor.u32 %v1057, 2147483648
  %v1334 = vxor.u32 %v1060, 2147483648
  %v1335 = vxor.u32 %v1065, 2147483648
  %v1336 = vxor.u32 %v1068, 2147483648
  %v1337 = vxor.u32 %v1073, 2147483648
  %v1338 = vxor.u32 %v1076, 2147483648
  %v1339 = vxor.u32 %v1081, 2147483648
  %v1340 = vxor.u32 %v1084, 2147483648
  %v1341 = vxor.u32 %v1089, 2147483648
  %v1342 = vxor.u32 %v1092, 2147483648
  %v1343 = vxor.u32 %v1097, 2147483648
  %v1344 = vxor.u32 %v1100, 2147483648
  %v1345 = vxor.u32 %v1105, 2147483648
  %v1346 = vxor.u32 %v1108, 2147483648
  %v1347 = vxor.u32 %v1113, 2147483648
  %v1348 = vxor.u32 %v1116, 2147483648
  %v1349 = vxor.u32 %v1121, 2147483648
  %v1350 = vxor.u32 %v1124, 2147483648
  %v1351 = vxor.u32 %v1129, 2147483648
  %v1352 = vxor.u32 %v1132, 2147483648
  %v1353 = vxor.u32 %v1137, 2147483648
  %v1354 = vxor.u32 %v1140, 2147483648
  %v1355 = vxor.u32 %v1145, 2147483648
  %v1356 = vxor.u32 %v1148, 2147483648
  %v1357 = vxor.u32 %v1153, 2147483648
  %v1358 = vxor.u32 %v1156, 2147483648
  %v1359 = vxor.u32 %v1161, 2147483648
  %v1360 = vxor.u32 %v1164, 2147483648
  %v1361 = vxor.u32 %v1169, 2147483648
  %v1362 = vxor.u32 %v1172, 2147483648
  %v1363 = vxor.u32 %v1177, 2147483648
  %v1364 = vxor.u32 %v1180, 2147483648
  %v1365 = vxor.u32 %v1185, 2147483648
  %v1366 = vxor.u32 %v1188, 2147483648
  %v1367 = vxor.u32 %v1193, 2147483648
  %v1368 = vxor.u32 %v1196, 2147483648
  %v1369 = vxor.u32 %v1201, 2147483648
  %v1370 = vxor.u32 %v1204, 2147483648
  %v1371 = vxor.u32 %v1209, 2147483648
  %v1372 = vxor.u32 %v1212, 2147483648
  %v1373 = vxor.u32 %v1217, 2147483648
  %v1374 = vxor.u32 %v1220, 2147483648
  %v1375 = vxor.u32 %v1225, 2147483648
  %v1376 = vxor.u32 %v1228, 2147483648
  %v1377 = vxor.u32 %v1233, 2147483648
  %v1378 = vxor.u32 %v1236, 2147483648
  %v1379 = vxor.u32 %v1241, 2147483648
  %v1380 = vxor.u32 %v1244, 2147483648
  %v1381 = vxor.u32 %v1249, 2147483648
  %v1382 = vxor.u32 %v1252, 2147483648
  %v1383 = vxor.u32 %v1257, 2147483648
  %v1384 = vxor.u32 %v1260, 2147483648
  %v1385 = vxor.u32 %v1265, 2147483648
  %v1386 = vxor.u32 %v1268, 2147483648
  %v1387 = vxor.u32 %v1273, 2147483648
  %v1388 = vxor.u32 %v1276, 2147483648
  %v1389 = vxor.u32 %v1281, 2147483648
  %v1390 = vxor.u32 %v1284, 2147483648
  %v1391 = vxor.u32 %v1289, 2147483648
  %v1392 = vxor.u32 %v1292, 2147483648
  %v1393 = vmul.f32 %v1295, 1.442695
  %v1394 = vpow.pop %v1393
  %v1395 = vmul.f32 %v1296, 1.442695
  %v1396 = vpow.pop %v1395
  %v1397 = vmul.f32 %v1297, 1.442695
  %v1398 = vpow.pop %v1397
  %v1399 = vmul.f32 %v1298, 1.442695
  %v1400 = vpow.pop %v1399
  %v1401 = vmul.f32 %v1299, 1.442695
  %v1402 = vpow.pop %v1401
  %v1403 = vmul.f32 %v1300, 1.442695
  %v1404 = vpow.pop %v1403
  %v1405 = vmul.f32 %v1301, 1.442695
  %v1406 = vpow.pop %v1405
  %v1407 = vmul.f32 %v1302, 1.442695
  %v1408 = vpow.pop %v1407
  %v1409 = vmul.f32 %v1303, 1.442695
  %v1410 = vpow.pop %v1409
  %v1411 = vmul.f32 %v1304, 1.442695
  %v1412 = vpow.pop %v1411
  %v1413 = vmul.f32 %v1305, 1.442695
  %v1414 = vpow.pop %v1413
  %v1415 = vmul.f32 %v1306, 1.442695
  %v1416 = vpow.pop %v1415
  %v1417 = vmul.f32 %v1307, 1.442695
  %v1418 = vpow.pop %v1417
  %v1419 = vmul.f32 %v1308, 1.442695
  %v1420 = vpow.pop %v1419
  %v1421 = vmul.f32 %v1309, 1.442695
  %v1422 = vpow.pop %v1421
  %v1423 = vmul.f32 %v1310, 1.442695
  %v1424 = vpow.pop %v1423
  %v1425 = vmul.f32 %v1311, 1.442695
  %v1426 = vpow.pop %v1425
  %v1427 = vmul.f32 %v1312, 1.442695
  %v1428 = vpow.pop %v1427
  %v1429 = vmul.f32 %v1313, 1.442695
  %v1430 = vpow.pop %v1429
  %v1431 = vmul.f32 %v1314, 1.442695
  %v1432 = vpow.pop %v1431
  %v1433 = vmul.f32 %v1315, 1.442695
  %v1434 = vpow.pop %v1433
  %v1435 = vmul.f32 %v1316, 1.442695
  %v1436 = vpow.pop %v1435
  %v1437 = vmul.f32 %v1317, 1.442695
  %v1438 = vpow.pop %v1437
  %v1439 = vmul.f32 %v1318, 1.442695
  %v1440 = vpow.pop %v1439
  %v1441 = vmul.f32 %v1319, 1.442695
  %v1442 = vpow.pop %v1441
  %v1443 = vmul.f32 %v1320, 1.442695
  %v1444 = vpow.pop %v1443
  %v1445 = vmul.f32 %v1321, 1.442695
  %v1446 = vpow.pop %v1445
  %v1447 = vmul.f32 %v1322, 1.442695
  %v1448 = vpow.pop %v1447
  %v1449 = vmul.f32 %v1323, 1.442695
  %v1450 = vpow.pop %v1449
  %v1451 = vmul.f32 %v1324, 1.442695
  %v1452 = vpow.pop %v1451
  %v1453 = vmul.f32 %v1325, 1.442695
  %v1454 = vpow.pop %v1453
  %v1455 = vmul.f32 %v1326, 1.442695
  %v1456 = vpow.pop %v1455
  %v1457 = vmul.f32 %v1327, 1.442695
  %v1458 = vpow.pop %v1457
  %v1459 = vmul.f32 %v1328, 1.442695
  %v1460 = vpow.pop %v1459
  %v1461 = vmul.f32 %v1329, 1.442695
  %v1462 = vpow.pop %v1461
  %v1463 = vmul.f32 %v1330, 1.442695
  %v1464 = vpow.pop %v1463
  %v1465 = vmul.f32 %v1331, 1.442695
  %v1466 = vpow.pop %v1465
  %v1467 = vmul.f32 %v1332, 1.442695
  %v1468 = vpow.pop %v1467
  %v1469 = vmul.f32 %v1333, 1.442695
  %v1470 = vpow.pop %v1469
  %v1471 = vmul.f32 %v1334, 1.442695
  %v1472 = vpow.pop %v1471
  %v1473 = vmul.f32 %v1335, 1.442695
  %v1474 = vpow.pop %v1473
  %v1475 = vmul.f32 %v1336, 1.442695
  %v1476 = vpow.pop %v1475
  %v1477 = vmul.f32 %v1337, 1.442695
  %v1478 = vpow.pop %v1477
  %v1479 = vmul.f32 %v1338, 1.442695
  %v1480 = vpow.pop %v1479
  %v1481 = vmul.f32 %v1339, 1.442695
  %v1482 = vpow.pop %v1481
  %v1483 = vmul.f32 %v1340, 1.442695
  %v1484 = vpow.pop %v1483
  %v1485 = vmul.f32 %v1341, 1.442695
  %v1486 = vpow.pop %v1485
  %v1487 = vmul.f32 %v1342, 1.442695
  %v1488 = vpow.pop %v1487
  %v1489 = vmul.f32 %v1343, 1.442695
  %v1490 = vpow.pop %v1489
  %v1491 = vmul.f32 %v1344, 1.442695
  %v1492 = vpow.pop %v1491
  %v1493 = vmul.f32 %v1345, 1.442695
  %v1494 = vpow.pop %v1493
  %v1495 = vmul.f32 %v1346, 1.442695
  %v1496 = vpow.pop %v1495
  %v1497 = vmul.f32 %v1347, 1.442695
  %v1498 = vpow.pop %v1497
  %v1499 = vmul.f32 %v1348, 1.442695
  %v1500 = vpow.pop %v1499
  %v1501 = vmul.f32 %v1349, 1.442695
  %v1502 = vpow.pop %v1501
  %v1503 = vmul.f32 %v1350, 1.442695
  %v1504 = vpow.pop %v1503
  %v1505 = vmul.f32 %v1351, 1.442695
  %v1506 = vpow.pop %v1505
  %v1507 = vmul.f32 %v1352, 1.442695
  %v1508 = vpow.pop %v1507
  %v1509 = vmul.f32 %v1353, 1.442695
  %v1510 = vpow.pop %v1509
  %v1511 = vmul.f32 %v1354, 1.442695
  %v1512 = vpow.pop %v1511
  %v1513 = vmul.f32 %v1355, 1.442695
  %v1514 = vpow.pop %v1513
  %v1515 = vmul.f32 %v1356, 1.442695
  %v1516 = vpow.pop %v1515
  %v1517 = vmul.f32 %v1357, 1.442695
  %v1518 = vpow.pop %v1517
  %v1519 = vmul.f32 %v1358, 1.442695
  %v1520 = vpow.pop %v1519
  %v1521 = vmul.f32 %v1359, 1.442695
  %v1522 = vpow.pop %v1521
  %v1523 = vmul.f32 %v1360, 1.442695
  %v1524 = vpow.pop %v1523
  %v1525 = vmul.f32 %v1361, 1.442695
  %v1526 = vpow.pop %v1525
  %v1527 = vmul.f32 %v1362, 1.442695
  %v1528 = vpow.pop %v1527
  %v1529 = vmul.f32 %v1363, 1.442695
  %v1530 = vpow.pop %v1529
  %v1531 = vmul.f32 %v1364, 1.442695
  %v1532 = vpow.pop %v1531
  %v1533 = vmul.f32 %v1365, 1.442695
  %v1534 = vpow.pop %v1533
  %v1535 = vmul.f32 %v1366, 1.442695
  %v1536 = vpow.pop %v1535
  %v1537 = vmul.f32 %v1367, 1.442695
  %v1538 = vpow.pop %v1537
  %v1539 = vmul.f32 %v1368, 1.442695
  %v1540 = vpow.pop %v1539
  %v1541 = vmul.f32 %v1369, 1.442695
  %v1542 = vpow.pop %v1541
  %v1543 = vmul.f32 %v1370, 1.442695
  %v1544 = vpow.pop %v1543
  %v1545 = vmul.f32 %v1371, 1.442695
  %v1546 = vpow.pop %v1545
  %v1547 = vmul.f32 %v1372, 1.442695
  %v1548 = vpow.pop %v1547
  %v1549 = vmul.f32 %v1373, 1.442695
  %v1550 = vpow.pop %v1549
  %v1551 = vmul.f32 %v1374, 1.442695
  %v1552 = vpow.pop %v1551
  %v1553 = vmul.f32 %v1375, 1.442695
  %v1554 = vpow.pop %v1553
  %v1555 = vmul.f32 %v1376, 1.442695
  %v1556 = vpow.pop %v1555
  %v1557 = vmul.f32 %v1377, 1.442695
  %v1558 = vpow.pop %v1557
  %v1559 = vmul.f32 %v1378, 1.442695
  %v1560 = vpow.pop %v1559
  %v1561 = vmul.f32 %v1379, 1.442695
  %v1562 = vpow.pop %v1561
  %v1563 = vmul.f32 %v1380, 1.442695
  %v1564 = vpow.pop %v1563
  %v1565 = vmul.f32 %v1381, 1.442695
  %v1566 = vpow.pop %v1565
  %v1567 = vmul.f32 %v1382, 1.442695
  %v1568 = vpow.pop %v1567
  %v1569 = vmul.f32 %v1383, 1.442695
  %v1570 = vpow.pop %v1569
  %v1571 = vmul.f32 %v1384, 1.442695
  %v1572 = vpow.pop %v1571
  %v1573 = vmul.f32 %v1385, 1.442695
  %v1574 = vpow.pop %v1573
  %v1575 = vmul.f32 %v1386, 1.442695
  %v1576 = vpow.pop %v1575
  %v1577 = vmul.f32 %v1387, 1.442695
  %v1578 = vpow.pop %v1577
  %v1579 = vmul.f32 %v1388, 1.442695
  %v1580 = vpow.pop %v1579
  %v1581 = vmul.f32 %v1389, 1.442695
  %v1582 = vpow.pop %v1581
  %v1583 = vmul.f32 %v1390, 1.442695
  %v1584 = vpow.pop %v1583
  %v1585 = vmul.f32 %v1391, 1.442695
  %v1586 = vpow.pop %v1585
  %v1587 = vmul.f32 %v1392, 1.442695
  %v1588 = vpow.pop %v1587
  %v1589 = vadd.f32 %v1394, 1.0
  %v1590 = vadd.f32 %v1396, 1.0
  %v1591 = vadd.f32 %v1398, 1.0
  %v1592 = vadd.f32 %v1400, 1.0
  %v1593 = vadd.f32 %v1402, 1.0
  %v1594 = vadd.f32 %v1404, 1.0
  %v1595 = vadd.f32 %v1406, 1.0
  %v1596 = vadd.f32 %v1408, 1.0
  %v1597 = vadd.f32 %v1410, 1.0
  %v1598 = vadd.f32 %v1412, 1.0
  %v1599 = vadd.f32 %v1414, 1.0
  %v1600 = vadd.f32 %v1416, 1.0
  %v1601 = vadd.f32 %v1418, 1.0
  %v1602 = vadd.f32 %v1420, 1.0
  %v1603 = vadd.f32 %v1422, 1.0
  %v1604 = vadd.f32 %v1424, 1.0
  %v1605 = vadd.f32 %v1426, 1.0
  %v1606 = vadd.f32 %v1428, 1.0
  %v1607 = vadd.f32 %v1430, 1.0
  %v1608 = vadd.f32 %v1432, 1.0
  %v1609 = vadd.f32 %v1434, 1.0
  %v1610 = vadd.f32 %v1436, 1.0
  %v1611 = vadd.f32 %v1438, 1.0
  %v1612 = vadd.f32 %v1440, 1.0
  %v1613 = vadd.f32 %v1442, 1.0
  %v1614 = vadd.f32 %v1444, 1.0
  %v1615 = vadd.f32 %v1446, 1.0
  %v1616 = vadd.f32 %v1448, 1.0
  %v1617 = vadd.f32 %v1450, 1.0
  %v1618 = vadd.f32 %v1452, 1.0
  %v1619 = vadd.f32 %v1454, 1.0
  %v1620 = vadd.f32 %v1456, 1.0
  %v1621 = vadd.f32 %v1458, 1.0
  %v1622 = vadd.f32 %v1460, 1.0
  %v1623 = vadd.f32 %v1462, 1.0
  %v1624 = vadd.f32 %v1464, 1.0
  %v1625 = vadd.f32 %v1466, 1.0
  %v1626 = vadd.f32 %v1468, 1.0
  %v1627 = vadd.f32 %v1470, 1.0
  %v1628 = vadd.f32 %v1472, 1.0
  %v1629 = vadd.f32 %v1474, 1.0
  %v1630 = vadd.f32 %v1476, 1.0
  %v1631 = vadd.f32 %v1478, 1.0
  %v1632 = vadd.f32 %v1480, 1.0
  %v1633 = vadd.f32 %v1482, 1.0
  %v1634 = vadd.f32 %v1484, 1.0
  %v1635 = vadd.f32 %v1486, 1.0
  %v1636 = vadd.f32 %v1488, 1.0
  %v1637 = vadd.f32 %v1490, 1.0
  %v1638 = vadd.f32 %v1492, 1.0
  %v1639 = vadd.f32 %v1494, 1.0
  %v1640 = vadd.f32 %v1496, 1.0
  %v1641 = vadd.f32 %v1498, 1.0
  %v1642 = vadd.f32 %v1500, 1.0
  %v1643 = vadd.f32 %v1502, 1.0
  %v1644 = vadd.f32 %v1504, 1.0
  %v1645 = vadd.f32 %v1506, 1.0
  %v1646 = vadd.f32 %v1508, 1.0
  %v1647 = vadd.f32 %v1510, 1.0
  %v1648 = vadd.f32 %v1512, 1.0
  %v1649 = vadd.f32 %v1514, 1.0
  %v1650 = vadd.f32 %v1516, 1.0
  %v1651 = vadd.f32 %v1518, 1.0
  %v1652 = vadd.f32 %v1520, 1.0
  %v1653 = vadd.f32 %v1522, 1.0
  %v1654 = vadd.f32 %v1524, 1.0
  %v1655 = vadd.f32 %v1526, 1.0
  %v1656 = vadd.f32 %v1528, 1.0
  %v1657 = vadd.f32 %v1530, 1.0
  %v1658 = vadd.f32 %v1532, 1.0
  %v1659 = vadd.f32 %v1534, 1.0
  %v1660 = vadd.f32 %v1536, 1.0
  %v1661 = vadd.f32 %v1538, 1.0
  %v1662 = vadd.f32 %v1540, 1.0
  %v1663 = vadd.f32 %v1542, 1.0
  %v1664 = vadd.f32 %v1544, 1.0
  %v1665 = vadd.f32 %v1546, 1.0
  %v1666 = vadd.f32 %v1548, 1.0
  %v1667 = vadd.f32 %v1550, 1.0
  %v1668 = vadd.f32 %v1552, 1.0
  %v1669 = vadd.f32 %v1554, 1.0
  %v1670 = vadd.f32 %v1556, 1.0
  %v1671 = vadd.f32 %v1558, 1.0
  %v1672 = vadd.f32 %v1560, 1.0
  %v1673 = vadd.f32 %v1562, 1.0
  %v1674 = vadd.f32 %v1564, 1.0
  %v1675 = vadd.f32 %v1566, 1.0
  %v1676 = vadd.f32 %v1568, 1.0
  %v1677 = vadd.f32 %v1570, 1.0
  %v1678 = vadd.f32 %v1572, 1.0
  %v1679 = vadd.f32 %v1574, 1.0
  %v1680 = vadd.f32 %v1576, 1.0
  %v1681 = vadd.f32 %v1578, 1.0
  %v1682 = vadd.f32 %v1580, 1.0
  %v1683 = vadd.f32 %v1582, 1.0
  %v1684 = vadd.f32 %v1584, 1.0
  %v1685 = vadd.f32 %v1586, 1.0
  %v1686 = vadd.f32 %v1588, 1.0
  %v1687 = vrcp.pop %v1589
  %v1688 = vmul.f32 1.0, %v1687
  %v1689 = vrcp.pop %v1590
  %v1690 = vmul.f32 1.0, %v1689
  %v1691 = vrcp.pop %v1591
  %v1692 = vmul.f32 1.0, %v1691
  %v1693 = vrcp.pop %v1592
  %v1694 = vmul.f32 1.0, %v1693
  %v1695 = vrcp.pop %v1593
  %v1696 = vmul.f32 1.0, %v1695
  %v1697 = vrcp.pop %v1594
  %v1698 = vmul.f32 1.0, %v1697
  %v1699 = vrcp.pop %v1595
  %v1700 = vmul.f32 1.0, %v1699
  %v1701 = vrcp.pop %v1596
  %v1702 = vmul.f32 1.0, %v1701
  %v1703 = vrcp.pop %v1597
  %v1704 = vmul.f32 1.0, %v1703
  %v1705 = vrcp.pop %v1598
  %v1706 = vmul.f32 1.0, %v1705
  %v1707 = vrcp.pop %v1599
  %v1708 = vmul.f32 1.0, %v1707
  %v1709 = vrcp.pop %v1600
  %v1710 = vmul.f32 1.0, %v1709
  %v1711 = vrcp.pop %v1601
  %v1712 = vmul.f32 1.0, %v1711
  %v1713 = vrcp.pop %v1602
  %v1714 = vmul.f32 1.0, %v1713
  %v1715 = vrcp.pop %v1603
  %v1716 = vmul.f32 1.0, %v1715
  %v1717 = vrcp.pop %v1604
  %v1718 = vmul.f32 1.0, %v1717
  %v1719 = vrcp.pop %v1605
  %v1720 = vmul.f32 1.0, %v1719
  %v1721 = vrcp.pop %v1606
  %v1722 = vmul.f32 1.0, %v1721
  %v1723 = vrcp.pop %v1607
  %v1724 = vmul.f32 1.0, %v1723
  %v1725 = vrcp.pop %v1608
  %v1726 = vmul.f32 1.0, %v1725
  %v1727 = vrcp.pop %v1609
  %v1728 = vmul.f32 1.0, %v1727
  %v1729 = vrcp.pop %v1610
  %v1730 = vmul.f32 1.0, %v1729
  %v1731 = vrcp.pop %v1611
  %v1732 = vmul.f32 1.0, %v1731
  %v1733 = vrcp.pop %v1612
  %v1734 = vmul.f32 1.0, %v1733
  %v1735 = vrcp.pop %v1613
  %v1736 = vmul.f32 1.0, %v1735
  %v1737 = vrcp.pop %v1614
  %v1738 = vmul.f32 1.0, %v1737
  %v1739 = vrcp.pop %v1615
  %v1740 = vmul.f32 1.0, %v1739
  %v1741 = vrcp.pop %v1616
  %v1742 = vmul.f32 1.0, %v1741
  %v1743 = vrcp.pop %v1617
  %v1744 = vmul.f32 1.0, %v1743
  %v1745 = vrcp.pop %v1618
  %v1746 = vmul.f32 1.0, %v1745
  %v1747 = vrcp.pop %v1619
  %v1748 = vmul.f32 1.0, %v1747
  %v1749 = vrcp.pop %v1620
  %v1750 = vmul.f32 1.0, %v1749
  %v1751 = vrcp.pop %v1621
  %v1752 = vmul.f32 1.0, %v1751
  %v1753 = vrcp.pop %v1622
  %v1754 = vmul.f32 1.0, %v1753
  %v1755 = vrcp.pop %v1623
  %v1756 = vmul.f32 1.0, %v1755
  %v1757 = vrcp.pop %v1624
  %v1758 = vmul.f32 1.0, %v1757
  %v1759 = vrcp.pop %v1625
  %v1760 = vmul.f32 1.0, %v1759
  %v1761 = vrcp.pop %v1626
  %v1762 = vmul.f32 1.0, %v1761
  %v1763 = vrcp.pop %v1627
  %v1764 = vmul.f32 1.0, %v1763
  %v1765 = vrcp.pop %v1628
  %v1766 = vmul.f32 1.0, %v1765
  %v1767 = vrcp.pop %v1629
  %v1768 = vmul.f32 1.0, %v1767
  %v1769 = vrcp.pop %v1630
  %v1770 = vmul.f32 1.0, %v1769
  %v1771 = vrcp.pop %v1631
  %v1772 = vmul.f32 1.0, %v1771
  %v1773 = vrcp.pop %v1632
  %v1774 = vmul.f32 1.0, %v1773
  %v1775 = vrcp.pop %v1633
  %v1776 = vmul.f32 1.0, %v1775
  %v1777 = vrcp.pop %v1634
  %v1778 = vmul.f32 1.0, %v1777
  %v1779 = vrcp.pop %v1635
  %v1780 = vmul.f32 1.0, %v1779
  %v1781 = vrcp.pop %v1636
  %v1782 = vmul.f32 1.0, %v1781
  %v1783 = vrcp.pop %v1637
  %v1784 = vmul.f32 1.0, %v1783
  %v1785 = vrcp.pop %v1638
  %v1786 = vmul.f32 1.0, %v1785
  %v1787 = vrcp.pop %v1639
  %v1788 = vmul.f32 1.0, %v1787
  %v1789 = vrcp.pop %v1640
  %v1790 = vmul.f32 1.0, %v1789
  %v1791 = vrcp.pop %v1641
  %v1792 = vmul.f32 1.0, %v1791
  %v1793 = vrcp.pop %v1642
  %v1794 = vmul.f32 1.0, %v1793
  %v1795 = vrcp.pop %v1643
  %v1796 = vmul.f32 1.0, %v1795
  %v1797 = vrcp.pop %v1644
  %v1798 = vmul.f32 1.0, %v1797
  %v1799 = vrcp.pop %v1645
  %v1800 = vmul.f32 1.0, %v1799
  %v1801 = vrcp.pop %v1646
  %v1802 = vmul.f32 1.0, %v1801
  %v1803 = vrcp.pop %v1647
  %v1804 = vmul.f32 1.0, %v1803
  %v1805 = vrcp.pop %v1648
  %v1806 = vmul.f32 1.0, %v1805
  %v1807 = vrcp.pop %v1649
  %v1808 = vmul.f32 1.0, %v1807
  %v1809 = vrcp.pop %v1650
  %v1810 = vmul.f32 1.0, %v1809
  %v1811 = vrcp.pop %v1651
  %v1812 = vmul.f32 1.0, %v1811
  %v1813 = vrcp.pop %v1652
  %v1814 = vmul.f32 1.0, %v1813
  %v1815 = vrcp.pop %v1653
  %v1816 = vmul.f32 1.0, %v1815
  %v1817 = vrcp.pop %v1654
  %v1818 = vmul.f32 1.0, %v1817
  %v1819 = vrcp.pop %v1655
  %v1820 = vmul.f32 1.0, %v1819
  %v1821 = vrcp.pop %v1656
  %v1822 = vmul.f32 1.0, %v1821
  %v1823 = vrcp.pop %v1657
  %v1824 = vmul.f32 1.0, %v1823
  %v1825 = vrcp.pop %v1658
  %v1826 = vmul.f32 1.0, %v1825
  %v1827 = vrcp.pop %v1659
  %v1828 = vmul.f32 1.0, %v1827
  %v1829 = vrcp.pop %v1660
  %v1830 = vmul.f32 1.0, %v1829
  %v1831 = vrcp.pop %v1661
  %v1832 = vmul.f32 1.0, %v1831
  %v1833 = vrcp.pop %v1662
  %v1834 = vmul.f32 1.0, %v1833
  %v1835 = vrcp.pop %v1663
  %v1836 = vmul.f32 1.0, %v1835
  %v1837 = vrcp.pop %v1664
  %v1838 = vmul.f32 1.0, %v1837
  %v1839 = vrcp.pop %v1665
  %v1840 = vmul.f32 1.0, %v1839
  %v1841 = vrcp.pop %v1666
  %v1842 = vmul.f32 1.0, %v1841
  %v1843 = vrcp.pop %v1667
  %v1844 = vmul.f32 1.0, %v1843
  %v1845 = vrcp.pop %v1668
  %v1846 = vmul.f32 1.0, %v1845
  %v1847 = vrcp.pop %v1669
  %v1848 = vmul.f32 1.0, %v1847
  %v1849 = vrcp.pop %v1670
  %v1850 = vmul.f32 1.0, %v1849
  %v1851 = vrcp.pop %v1671
  %v1852 = vmul.f32 1.0, %v1851
  %v1853 = vrcp.pop %v1672
  %v1854 = vmul.f32 1.0, %v1853
  %v1855 = vrcp.pop %v1673
  %v1856 = vmul.f32 1.0, %v1855
  %v1857 = vrcp.pop %v1674
  %v1858 = vmul.f32 1.0, %v1857
  %v1859 = vrcp.pop %v1675
  %v1860 = vmul.f32 1.0, %v1859
  %v1861 = vrcp.pop %v1676
  %v1862 = vmul.f32 1.0, %v1861
  %v1863 = vrcp.pop %v1677
  %v1864 = vmul.f32 1.0, %v1863
  %v1865 = vrcp.pop %v1678
  %v1866 = vmul.f32 1.0, %v1865
  %v1867 = vrcp.pop %v1679
  %v1868 = vmul.f32 1.0, %v1867
  %v1869 = vrcp.pop %v1680
  %v1870 = vmul.f32 1.0, %v1869
  %v1871 = vrcp.pop %v1681
  %v1872 = vmul.f32 1.0, %v1871
  %v1873 = vrcp.pop %v1682
  %v1874 = vmul.f32 1.0, %v1873
  %v1875 = vrcp.pop %v1683
  %v1876 = vmul.f32 1.0, %v1875
  %v1877 = vrcp.pop %v1684
  %v1878 = vmul.f32 1.0, %v1877
  %v1879 = vrcp.pop %v1685
  %v1880 = vmul.f32 1.0, %v1879
  %v1881 = vrcp.pop %v1686
  %v1882 = vmul.f32 1.0, %v1881
  %v1883 = vld [vmem:[%s3] sm:$0xff]
  %v1884 = vld [vmem:[%s3 + $0x8] sm:$0xff]
  %v1885 = vld [vmem:[%s3 + $0x10] sm:$0xff]
  %v1886 = vld [vmem:[%s3 + $0x18] sm:$0xff]
  %v1887 = vld [vmem:[%s3 + $0x20] sm:$0xff]
  %v1888 = vld [vmem:[%s3 + $0x28] sm:$0xff]
  %v1889 = vld [vmem:[%s3 + $0x30] sm:$0xff]
  %v1890 = vld [vmem:[%s3 + $0x38] sm:$0xff]
  %v1891 = vld [vmem:[%s3 + $0x40] sm:$0xff]
  %v1892 = vld [vmem:[%s3 + $0x48] sm:$0xff]
  %v1893 = vld [vmem:[%s3 + $0x50] sm:$0xff]
  %v1894 = vld [vmem:[%s3 + $0x58] sm:$0xff]
  %v1895 = vld [vmem:[%s3 + $0x60] sm:$0xff]
  %v1896 = vld [vmem:[%s3 + $0x68] sm:$0xff]
  %v1897 = vld [vmem:[%s3 + $0x70] sm:$0xff]
  %v1898 = vld [vmem:[%s3 + $0x78] sm:$0xff]
  %v1899 = vld [vmem:[%s3 + $0x80] sm:$0xff]
  %v1900 = vld [vmem:[%s3 + $0x88] sm:$0xff]
  %v1901 = vld [vmem:[%s3 + $0x90] sm:$0xff]
  %v1902 = vld [vmem:[%s3 + $0x98] sm:$0xff]
  %v1903 = vld [vmem:[%s3 + $0xa0] sm:$0xff]
  %v1904 = vld [vmem:[%s3 + $0xa8] sm:$0xff]
  %v1905 = vld [vmem:[%s3 + $0xb0] sm:$0xff]
  %v1906 = vld [vmem:[%s3 + $0xb8] sm:$0xff]
  %v1907 = vld [vmem:[%s3 + $0xc0] sm:$0xff]
  %v1908 = vld [vmem:[%s3 + $0xc8] sm:$0xff]
  %v1909 = vld [vmem:[%s3 + $0xd0] sm:$0xff]
  %v1910 = vld [vmem:[%s3 + $0xd8] sm:$0xff]
  %v1911 = vld [vmem:[%s3 + $0xe0] sm:$0xff]
  %v1912 = vld [vmem:[%s3 + $0xe8] sm:$0xff]
  %v1913 = vld [vmem:[%s3 + $0xf0] sm:$0xff]
  %v1914 = vld [vmem:[%s3 + $0xf8] sm:$0xff]
  %v1915 = vld [vmem:[%s3 + $0x100] sm:$0xff]
  %v1916 = vld [vmem:[%s3 + $0x108] sm:$0xff]
  %v1917 = vld [vmem:[%s3 + $0x110] sm:$0xff]
  %v1918 = vld [vmem:[%s3 + $0x118] sm:$0xff]
  %v1919 = vld [vmem:[%s3 + $0x120] sm:$0xff]
  %v1920 = vld [vmem:[%s3 + $0x128] sm:$0xff]
  %v1921 = vld [vmem:[%s3 + $0x130] sm:$0xff]
  %v1922 = vld [vmem:[%s3 + $0x138] sm:$0xff]
  %v1923 = vld [vmem:[%s3 + $0x140] sm:$0xff]
  %v1924 = vld [vmem:[%s3 + $0x148] sm:$0xff]
  %v1925 = vld [vmem:[%s3 + $0x150] sm:$0xff]
  %v1926 = vld [vmem:[%s3 + $0x158] sm:$0xff]
  %v1927 = vld [vmem:[%s3 + $0x160] sm:$0xff]
  %v1928 = vld [vmem:[%s3 + $0x168] sm:$0xff]
  %v1929 = vld [vmem:[%s3 + $0x170] sm:$0xff]
  %v1930 = vld [vmem:[%s3 + $0x178] sm:$0xff]
  %v1931 = vld [vmem:[%s3 + $0x180] sm:$0xff]
  %v1932 = vld [vmem:[%s3 + $0x188] sm:$0xff]
  %v1933 = vld [vmem:[%s3 + $0x190] sm:$0xff]
  %v1934 = vld [vmem:[%s3 + $0x198] sm:$0xff]
  %v1935 = vld [vmem:[%s3 + $0x1a0] sm:$0xff]
  %v1936 = vld [vmem:[%s3 + $0x1a8] sm:$0xff]
  %v1937 = vld [vmem:[%s3 + $0x1b0] sm:$0xff]
  %v1938 = vld [vmem:[%s3 + $0x1b8] sm:$0xff]
  %v1939 = vld [vmem:[%s3 + $0x1c0] sm:$0xff]
  %v1940 = vld [vmem:[%s3 + $0x1c8] sm:$0xff]
  %v1941 = vld [vmem:[%s3 + $0x1d0] sm:$0xff]
  %v1942 = vld [vmem:[%s3 + $0x1d8] sm:$0xff]
  %v1943 = vld [vmem:[%s3 + $0x1e0] sm:$0xff]
  %v1944 = vld [vmem:[%s3 + $0x1e8] sm:$0xff]
  %v1945 = vld [vmem:[%s3 + $0x1f0] sm:$0xff]
  %v1946 = vld [vmem:[%s3 + $0x1f8] sm:$0xff]
  %v1947 = vld [vmem:[%s3 + $0x200] sm:$0xff]
  %v1948 = vld [vmem:[%s3 + $0x208] sm:$0xff]
  %v1949 = vld [vmem:[%s3 + $0x210] sm:$0xff]
  %v1950 = vld [vmem:[%s3 + $0x218] sm:$0xff]
  %v1951 = vld [vmem:[%s3 + $0x220] sm:$0xff]
  %v1952 = vld [vmem:[%s3 + $0x228] sm:$0xff]
  %v1953 = vld [vmem:[%s3 + $0x230] sm:$0xff]
  %v1954 = vld [vmem:[%s3 + $0x238] sm:$0xff]
  %v1955 = vld [vmem:[%s3 + $0x240] sm:$0xff]
  %v1956 = vld [vmem:[%s3 + $0x248] sm:$0xff]
  %v1957 = vld [vmem:[%s3 + $0x250] sm:$0xff]
  %v1958 = vld [vmem:[%s3 + $0x258] sm:$0xff]
  %v1959 = vld [vmem:[%s3 + $0x260] sm:$0xff]
  %v1960 = vld [vmem:[%s3 + $0x268] sm:$0xff]
  %v1961 = vld [vmem:[%s3 + $0x270] sm:$0xff]
  %v1962 = vld [vmem:[%s3 + $0x278] sm:$0xff]
  %v1963 = vld [vmem:[%s3 + $0x280] sm:$0xff]
  %v1964 = vld [vmem:[%s3 + $0x288] sm:$0xff]
  %v1965 = vld [vmem:[%s3 + $0x290] sm:$0xff]
  %v1966 = vld [vmem:[%s3 + $0x298] sm:$0xff]
  %v1967 = vld [vmem:[%s3 + $0x2a0] sm:$0xff]
  %v1968 = vld [vmem:[%s3 + $0x2a8] sm:$0xff]
  %v1969 = vld [vmem:[%s3 + $0x2b0] sm:$0xff]
  %v1970 = vld [vmem:[%s3 + $0x2b8] sm:$0xff]
  %v1971 = vld [vmem:[%s3 + $0x2c0] sm:$0xff]
  %v1972 = vld [vmem:[%s3 + $0x2c8] sm:$0xff]
  %v1973 = vld [vmem:[%s3 + $0x2d0] sm:$0xff]
  %v1974 = vld [vmem:[%s3 + $0x2d8] sm:$0xff]
  %v1975 = vld [vmem:[%s3 + $0x2e0] sm:$0xff]
  %v1976 = vld [vmem:[%s3 + $0x2e8] sm:$0xff]
  %v1977 = vld [vmem:[%s3 + $0x2f0] sm:$0xff]
  %v1978 = vld [vmem:[%s3 + $0x2f8] sm:$0xff]
  %v1979 = vld [vmem:[%s3 + $0x300] sm:$0xff]
  %v1980 = vld [vmem:[%s3 + $0x308] sm:$0xff]
  %1982 = vset.pattern.permute.xlu0 0
  %1983 = vperm.xlu0 %1982, %v1688
  %v1984 = vpop.permute.xlu0 %1983
  %1987 = vset.pattern.permute.xlu0 0
  %1988 = vperm.xlu0 %1987, %v1690
  %v1989 = vpop.permute.xlu0 %1988
  %1992 = vset.pattern.permute.xlu0 0
  %1993 = vperm.xlu0 %1992, %v1692
  %v1994 = vpop.permute.xlu0 %1993
  %1997 = vset.pattern.permute.xlu0 0
  %1998 = vperm.xlu0 %1997, %v1694
  %v1999 = vpop.permute.xlu0 %1998
  %2002 = vset.pattern.permute.xlu0 0
  %2003 = vperm.xlu0 %2002, %v1696
  %v2004 = vpop.permute.xlu0 %2003
  %2007 = vset.pattern.permute.xlu0 0
  %2008 = vperm.xlu0 %2007, %v1698
  %v2009 = vpop.permute.xlu0 %2008
  %2012 = vset.pattern.permute.xlu0 0
  %2013 = vperm.xlu0 %2012, %v1700
  %v2014 = vpop.permute.xlu0 %2013
  %2017 = vset.pattern.permute.xlu0 0
  %2018 = vperm.xlu0 %2017, %v1702
  %v2019 = vpop.permute.xlu0 %2018
  %2022 = vset.pattern.permute.xlu0 0
  %2023 = vperm.xlu0 %2022, %v1704
  %v2024 = vpop.permute.xlu0 %2023
  %2027 = vset.pattern.permute.xlu0 0
  %2028 = vperm.xlu0 %2027, %v1706
  %v2029 = vpop.permute.xlu0 %2028
  %2032 = vset.pattern.permute.xlu0 0
  %2033 = vperm.xlu0 %2032, %v1708
  %v2034 = vpop.permute.xlu0 %2033
  %2037 = vset.pattern.permute.xlu0 0
  %2038 = vperm.xlu0 %2037, %v1710
  %v2039 = vpop.permute.xlu0 %2038
  %2042 = vset.pattern.permute.xlu0 0
  %2043 = vperm.xlu0 %2042, %v1712
  %v2044 = vpop.permute.xlu0 %2043
  %2047 = vset.pattern.permute.xlu0 0
  %2048 = vperm.xlu0 %2047, %v1714
  %v2049 = vpop.permute.xlu0 %2048
  %2052 = vset.pattern.permute.xlu0 0
  %2053 = vperm.xlu0 %2052, %v1716
  %v2054 = vpop.permute.xlu0 %2053
  %2057 = vset.pattern.permute.xlu0 0
  %2058 = vperm.xlu0 %2057, %v1718
  %v2059 = vpop.permute.xlu0 %2058
  %2062 = vset.pattern.permute.xlu0 0
  %2063 = vperm.xlu0 %2062, %v1720
  %v2064 = vpop.permute.xlu0 %2063
  %2067 = vset.pattern.permute.xlu0 0
  %2068 = vperm.xlu0 %2067, %v1722
  %v2069 = vpop.permute.xlu0 %2068
  %2072 = vset.pattern.permute.xlu0 0
  %2073 = vperm.xlu0 %2072, %v1724
  %v2074 = vpop.permute.xlu0 %2073
  %2077 = vset.pattern.permute.xlu0 0
  %2078 = vperm.xlu0 %2077, %v1726
  %v2079 = vpop.permute.xlu0 %2078
  %2082 = vset.pattern.permute.xlu0 0
  %2083 = vperm.xlu0 %2082, %v1728
  %v2084 = vpop.permute.xlu0 %2083
  %2087 = vset.pattern.permute.xlu0 0
  %2088 = vperm.xlu0 %2087, %v1730
  %v2089 = vpop.permute.xlu0 %2088
  %2092 = vset.pattern.permute.xlu0 0
  %2093 = vperm.xlu0 %2092, %v1732
  %v2094 = vpop.permute.xlu0 %2093
  %2097 = vset.pattern.permute.xlu0 0
  %2098 = vperm.xlu0 %2097, %v1734
  %v2099 = vpop.permute.xlu0 %2098
  %2102 = vset.pattern.permute.xlu0 0
  %2103 = vperm.xlu0 %2102, %v1736
  %v2104 = vpop.permute.xlu0 %2103
  %2107 = vset.pattern.permute.xlu0 0
  %2108 = vperm.xlu0 %2107, %v1738
  %v2109 = vpop.permute.xlu0 %2108
  %2112 = vset.pattern.permute.xlu0 0
  %2113 = vperm.xlu0 %2112, %v1740
  %v2114 = vpop.permute.xlu0 %2113
  %2117 = vset.pattern.permute.xlu0 0
  %2118 = vperm.xlu0 %2117, %v1742
  %v2119 = vpop.permute.xlu0 %2118
  %2122 = vset.pattern.permute.xlu0 0
  %2123 = vperm.xlu0 %2122, %v1744
  %v2124 = vpop.permute.xlu0 %2123
  %2127 = vset.pattern.permute.xlu0 0
  %2128 = vperm.xlu0 %2127, %v1746
  %v2129 = vpop.permute.xlu0 %2128
  %2132 = vset.pattern.permute.xlu0 0
  %2133 = vperm.xlu0 %2132, %v1748
  %v2134 = vpop.permute.xlu0 %2133
  %2137 = vset.pattern.permute.xlu0 0
  %2138 = vperm.xlu0 %2137, %v1750
  %v2139 = vpop.permute.xlu0 %2138
  %2142 = vset.pattern.permute.xlu0 0
  %2143 = vperm.xlu0 %2142, %v1752
  %v2144 = vpop.permute.xlu0 %2143
  %2147 = vset.pattern.permute.xlu0 0
  %2148 = vperm.xlu0 %2147, %v1754
  %v2149 = vpop.permute.xlu0 %2148
  %2152 = vset.pattern.permute.xlu0 0
  %2153 = vperm.xlu0 %2152, %v1756
  %v2154 = vpop.permute.xlu0 %2153
  %2157 = vset.pattern.permute.xlu0 0
  %2158 = vperm.xlu0 %2157, %v1758
  %v2159 = vpop.permute.xlu0 %2158
  %2162 = vset.pattern.permute.xlu0 0
  %2163 = vperm.xlu0 %2162, %v1760
  %v2164 = vpop.permute.xlu0 %2163
  %2167 = vset.pattern.permute.xlu0 0
  %2168 = vperm.xlu0 %2167, %v1762
  %v2169 = vpop.permute.xlu0 %2168
  %2172 = vset.pattern.permute.xlu0 0
  %2173 = vperm.xlu0 %2172, %v1764
  %v2174 = vpop.permute.xlu0 %2173
  %2177 = vset.pattern.permute.xlu0 0
  %2178 = vperm.xlu0 %2177, %v1766
  %v2179 = vpop.permute.xlu0 %2178
  %2182 = vset.pattern.permute.xlu0 0
  %2183 = vperm.xlu0 %2182, %v1768
  %v2184 = vpop.permute.xlu0 %2183
  %2187 = vset.pattern.permute.xlu0 0
  %2188 = vperm.xlu0 %2187, %v1770
  %v2189 = vpop.permute.xlu0 %2188
  %2192 = vset.pattern.permute.xlu0 0
  %2193 = vperm.xlu0 %2192, %v1772
  %v2194 = vpop.permute.xlu0 %2193
  %2197 = vset.pattern.permute.xlu0 0
  %2198 = vperm.xlu0 %2197, %v1774
  %v2199 = vpop.permute.xlu0 %2198
  %2202 = vset.pattern.permute.xlu0 0
  %2203 = vperm.xlu0 %2202, %v1776
  %v2204 = vpop.permute.xlu0 %2203
  %2207 = vset.pattern.permute.xlu0 0
  %2208 = vperm.xlu0 %2207, %v1778
  %v2209 = vpop.permute.xlu0 %2208
  %2212 = vset.pattern.permute.xlu0 0
  %2213 = vperm.xlu0 %2212, %v1780
  %v2214 = vpop.permute.xlu0 %2213
  %2217 = vset.pattern.permute.xlu0 0
  %2218 = vperm.xlu0 %2217, %v1782
  %v2219 = vpop.permute.xlu0 %2218
  %2222 = vset.pattern.permute.xlu0 0
  %2223 = vperm.xlu0 %2222, %v1784
  %v2224 = vpop.permute.xlu0 %2223
  %2227 = vset.pattern.permute.xlu0 0
  %2228 = vperm.xlu0 %2227, %v1786
  %v2229 = vpop.permute.xlu0 %2228
  %2232 = vset.pattern.permute.xlu0 0
  %2233 = vperm.xlu0 %2232, %v1788
  %v2234 = vpop.permute.xlu0 %2233
  %2237 = vset.pattern.permute.xlu0 0
  %2238 = vperm.xlu0 %2237, %v1790
  %v2239 = vpop.permute.xlu0 %2238
  %2242 = vset.pattern.permute.xlu0 0
  %2243 = vperm.xlu0 %2242, %v1792
  %v2244 = vpop.permute.xlu0 %2243
  %2247 = vset.pattern.permute.xlu0 0
  %2248 = vperm.xlu0 %2247, %v1794
  %v2249 = vpop.permute.xlu0 %2248
  %2252 = vset.pattern.permute.xlu0 0
  %2253 = vperm.xlu0 %2252, %v1796
  %v2254 = vpop.permute.xlu0 %2253
  %2257 = vset.pattern.permute.xlu0 0
  %2258 = vperm.xlu0 %2257, %v1798
  %v2259 = vpop.permute.xlu0 %2258
  %2262 = vset.pattern.permute.xlu0 0
  %2263 = vperm.xlu0 %2262, %v1800
  %v2264 = vpop.permute.xlu0 %2263
  %2267 = vset.pattern.permute.xlu0 0
  %2268 = vperm.xlu0 %2267, %v1802
  %v2269 = vpop.permute.xlu0 %2268
  %2272 = vset.pattern.permute.xlu0 0
  %2273 = vperm.xlu0 %2272, %v1804
  %v2274 = vpop.permute.xlu0 %2273
  %2277 = vset.pattern.permute.xlu0 0
  %2278 = vperm.xlu0 %2277, %v1806
  %v2279 = vpop.permute.xlu0 %2278
  %2282 = vset.pattern.permute.xlu0 0
  %2283 = vperm.xlu0 %2282, %v1808
  %v2284 = vpop.permute.xlu0 %2283
  %2287 = vset.pattern.permute.xlu0 0
  %2288 = vperm.xlu0 %2287, %v1810
  %v2289 = vpop.permute.xlu0 %2288
  %2292 = vset.pattern.permute.xlu0 0
  %2293 = vperm.xlu0 %2292, %v1812
  %v2294 = vpop.permute.xlu0 %2293
  %2297 = vset.pattern.permute.xlu0 0
  %2298 = vperm.xlu0 %2297, %v1814
  %v2299 = vpop.permute.xlu0 %2298
  %2302 = vset.pattern.permute.xlu0 0
  %2303 = vperm.xlu0 %2302, %v1816
  %v2304 = vpop.permute.xlu0 %2303
  %2307 = vset.pattern.permute.xlu0 0
  %2308 = vperm.xlu0 %2307, %v1818
  %v2309 = vpop.permute.xlu0 %2308
  %2312 = vset.pattern.permute.xlu0 0
  %2313 = vperm.xlu0 %2312, %v1820
  %v2314 = vpop.permute.xlu0 %2313
  %2317 = vset.pattern.permute.xlu0 0
  %2318 = vperm.xlu0 %2317, %v1822
  %v2319 = vpop.permute.xlu0 %2318
  %2322 = vset.pattern.permute.xlu0 0
  %2323 = vperm.xlu0 %2322, %v1824
  %v2324 = vpop.permute.xlu0 %2323
  %2327 = vset.pattern.permute.xlu0 0
  %2328 = vperm.xlu0 %2327, %v1826
  %v2329 = vpop.permute.xlu0 %2328
  %2332 = vset.pattern.permute.xlu0 0
  %2333 = vperm.xlu0 %2332, %v1828
  %v2334 = vpop.permute.xlu0 %2333
  %2337 = vset.pattern.permute.xlu0 0
  %2338 = vperm.xlu0 %2337, %v1830
  %v2339 = vpop.permute.xlu0 %2338
  %2342 = vset.pattern.permute.xlu0 0
  %2343 = vperm.xlu0 %2342, %v1832
  %v2344 = vpop.permute.xlu0 %2343
  %2347 = vset.pattern.permute.xlu0 0
  %2348 = vperm.xlu0 %2347, %v1834
  %v2349 = vpop.permute.xlu0 %2348
  %2352 = vset.pattern.permute.xlu0 0
  %2353 = vperm.xlu0 %2352, %v1836
  %v2354 = vpop.permute.xlu0 %2353
  %2357 = vset.pattern.permute.xlu0 0
  %2358 = vperm.xlu0 %2357, %v1838
  %v2359 = vpop.permute.xlu0 %2358
  %2362 = vset.pattern.permute.xlu0 0
  %2363 = vperm.xlu0 %2362, %v1840
  %v2364 = vpop.permute.xlu0 %2363
  %2367 = vset.pattern.permute.xlu0 0
  %2368 = vperm.xlu0 %2367, %v1842
  %v2369 = vpop.permute.xlu0 %2368
  %2372 = vset.pattern.permute.xlu0 0
  %2373 = vperm.xlu0 %2372, %v1844
  %v2374 = vpop.permute.xlu0 %2373
  %2377 = vset.pattern.permute.xlu0 0
  %2378 = vperm.xlu0 %2377, %v1846
  %v2379 = vpop.permute.xlu0 %2378
  %2382 = vset.pattern.permute.xlu0 0
  %2383 = vperm.xlu0 %2382, %v1848
  %v2384 = vpop.permute.xlu0 %2383
  %2387 = vset.pattern.permute.xlu0 0
  %2388 = vperm.xlu0 %2387, %v1850
  %v2389 = vpop.permute.xlu0 %2388
  %2392 = vset.pattern.permute.xlu0 0
  %2393 = vperm.xlu0 %2392, %v1852
  %v2394 = vpop.permute.xlu0 %2393
  %2397 = vset.pattern.permute.xlu0 0
  %2398 = vperm.xlu0 %2397, %v1854
  %v2399 = vpop.permute.xlu0 %2398
  %2402 = vset.pattern.permute.xlu0 0
  %2403 = vperm.xlu0 %2402, %v1856
  %v2404 = vpop.permute.xlu0 %2403
  %2407 = vset.pattern.permute.xlu0 0
  %2408 = vperm.xlu0 %2407, %v1858
  %v2409 = vpop.permute.xlu0 %2408
  %2412 = vset.pattern.permute.xlu0 0
  %2413 = vperm.xlu0 %2412, %v1860
  %v2414 = vpop.permute.xlu0 %2413
  %2417 = vset.pattern.permute.xlu0 0
  %2418 = vperm.xlu0 %2417, %v1862
  %v2419 = vpop.permute.xlu0 %2418
  %2422 = vset.pattern.permute.xlu0 0
  %2423 = vperm.xlu0 %2422, %v1864
  %v2424 = vpop.permute.xlu0 %2423
  %2427 = vset.pattern.permute.xlu0 0
  %2428 = vperm.xlu0 %2427, %v1866
  %v2429 = vpop.permute.xlu0 %2428
  %2432 = vset.pattern.permute.xlu0 0
  %2433 = vperm.xlu0 %2432, %v1868
  %v2434 = vpop.permute.xlu0 %2433
  %2437 = vset.pattern.permute.xlu0 0
  %2438 = vperm.xlu0 %2437, %v1870
  %v2439 = vpop.permute.xlu0 %2438
  %2442 = vset.pattern.permute.xlu0 0
  %2443 = vperm.xlu0 %2442, %v1872
  %v2444 = vpop.permute.xlu0 %2443
  %2447 = vset.pattern.permute.xlu0 0
  %2448 = vperm.xlu0 %2447, %v1874
  %v2449 = vpop.permute.xlu0 %2448
  %2452 = vset.pattern.permute.xlu0 0
  %2453 = vperm.xlu0 %2452, %v1876
  %v2454 = vpop.permute.xlu0 %2453
  %2457 = vset.pattern.permute.xlu0 0
  %2458 = vperm.xlu0 %2457, %v1878
  %v2459 = vpop.permute.xlu0 %2458
  %2462 = vset.pattern.permute.xlu0 0
  %2463 = vperm.xlu0 %2462, %v1880
  %v2464 = vpop.permute.xlu0 %2463
  %2467 = vset.pattern.permute.xlu0 0
  %2468 = vperm.xlu0 %2467, %v1882
  %v2469 = vpop.permute.xlu0 %2468
  %v2471 = vmul.f32 %v1883, %v1984
  %v2472 = vmul.f32 %v1884, %v1989
  %v2473 = vmul.f32 %v1885, %v1994
  %v2474 = vmul.f32 %v1886, %v1999
  %v2475 = vmul.f32 %v1887, %v2004
  %v2476 = vmul.f32 %v1888, %v2009
  %v2477 = vmul.f32 %v1889, %v2014
  %v2478 = vmul.f32 %v1890, %v2019
  %v2479 = vmul.f32 %v1891, %v2024
  %v2480 = vmul.f32 %v1892, %v2029
  %v2481 = vmul.f32 %v1893, %v2034
  %v2482 = vmul.f32 %v1894, %v2039
  %v2483 = vmul.f32 %v1895, %v2044
  %v2484 = vmul.f32 %v1896, %v2049
  %v2485 = vmul.f32 %v1897, %v2054
  %v2486 = vmul.f32 %v1898, %v2059
  %v2487 = vmul.f32 %v1899, %v2064
  %v2488 = vmul.f32 %v1900, %v2069
  %v2489 = vmul.f32 %v1901, %v2074
  %v2490 = vmul.f32 %v1902, %v2079
  %v2491 = vmul.f32 %v1903, %v2084
  %v2492 = vmul.f32 %v1904, %v2089
  %v2493 = vmul.f32 %v1905, %v2094
  %v2494 = vmul.f32 %v1906, %v2099
  %v2495 = vmul.f32 %v1907, %v2104
  %v2496 = vmul.f32 %v1908, %v2109
  %v2497 = vmul.f32 %v1909, %v2114
  %v2498 = vmul.f32 %v1910, %v2119
  %v2499 = vmul.f32 %v1911, %v2124
  %v2500 = vmul.f32 %v1912, %v2129
  %v2501 = vmul.f32 %v1913, %v2134
  %v2502 = vmul.f32 %v1914, %v2139
  %v2503 = vmul.f32 %v1915, %v2144
  %v2504 = vmul.f32 %v1916, %v2149
  %v2505 = vmul.f32 %v1917, %v2154
  %v2506 = vmul.f32 %v1918, %v2159
  %v2507 = vmul.f32 %v1919, %v2164
  %v2508 = vmul.f32 %v1920, %v2169
  %v2509 = vmul.f32 %v1921, %v2174
  %v2510 = vmul.f32 %v1922, %v2179
  %v2511 = vmul.f32 %v1923, %v2184
  %v2512 = vmul.f32 %v1924, %v2189
  %v2513 = vmul.f32 %v1925, %v2194
  %v2514 = vmul.f32 %v1926, %v2199
  %v2515 = vmul.f32 %v1927, %v2204
  %v2516 = vmul.f32 %v1928, %v2209
  %v2517 = vmul.f32 %v1929, %v2214
  %v2518 = vmul.f32 %v1930, %v2219
  %v2519 = vmul.f32 %v1931, %v2224
  %v2520 = vmul.f32 %v1932, %v2229
  %v2521 = vmul.f32 %v1933, %v2234
  %v2522 = vmul.f32 %v1934, %v2239
  %v2523 = vmul.f32 %v1935, %v2244
  %v2524 = vmul.f32 %v1936, %v2249
  %v2525 = vmul.f32 %v1937, %v2254
  %v2526 = vmul.f32 %v1938, %v2259
  %v2527 = vmul.f32 %v1939, %v2264
  %v2528 = vmul.f32 %v1940, %v2269
  %v2529 = vmul.f32 %v1941, %v2274
  %v2530 = vmul.f32 %v1942, %v2279
  %v2531 = vmul.f32 %v1943, %v2284
  %v2532 = vmul.f32 %v1944, %v2289
  %v2533 = vmul.f32 %v1945, %v2294
  %v2534 = vmul.f32 %v1946, %v2299
  %v2535 = vmul.f32 %v1947, %v2304
  %v2536 = vmul.f32 %v1948, %v2309
  %v2537 = vmul.f32 %v1949, %v2314
  %v2538 = vmul.f32 %v1950, %v2319
  %v2539 = vmul.f32 %v1951, %v2324
  %v2540 = vmul.f32 %v1952, %v2329
  %v2541 = vmul.f32 %v1953, %v2334
  %v2542 = vmul.f32 %v1954, %v2339
  %v2543 = vmul.f32 %v1955, %v2344
  %v2544 = vmul.f32 %v1956, %v2349
  %v2545 = vmul.f32 %v1957, %v2354
  %v2546 = vmul.f32 %v1958, %v2359
  %v2547 = vmul.f32 %v1959, %v2364
  %v2548 = vmul.f32 %v1960, %v2369
  %v2549 = vmul.f32 %v1961, %v2374
  %v2550 = vmul.f32 %v1962, %v2379
  %v2551 = vmul.f32 %v1963, %v2384
  %v2552 = vmul.f32 %v1964, %v2389
  %v2553 = vmul.f32 %v1965, %v2394
  %v2554 = vmul.f32 %v1966, %v2399
  %v2555 = vmul.f32 %v1967, %v2404
  %v2556 = vmul.f32 %v1968, %v2409
  %v2557 = vmul.f32 %v1969, %v2414
  %v2558 = vmul.f32 %v1970, %v2419
  %v2559 = vmul.f32 %v1971, %v2424
  %v2560 = vmul.f32 %v1972, %v2429
  %v2561 = vmul.f32 %v1973, %v2434
  %v2562 = vmul.f32 %v1974, %v2439
  %v2563 = vmul.f32 %v1975, %v2444
  %v2564 = vmul.f32 %v1976, %v2449
  %v2565 = vmul.f32 %v1977, %v2454
  %v2566 = vmul.f32 %v1978, %v2459
  %v2567 = vmul.f32 %v1979, %v2464
  %v2568 = vmul.f32 %v1980, %v2469
  %vm2569 = vcmask 400384
  %2570 = vst.msk [vmem:[%s4] sm:$0xff] %vm2569, %v2471
  %2571 = vst.msk [vmem:[%s4 + $0x8] sm:$0xff] %vm2569, %v2472
  %2572 = vst.msk [vmem:[%s4 + $0x10] sm:$0xff] %vm2569, %v2473
  %2573 = vst.msk [vmem:[%s4 + $0x18] sm:$0xff] %vm2569, %v2474
  %2574 = vst.msk [vmem:[%s4 + $0x20] sm:$0xff] %vm2569, %v2475
  %2575 = vst.msk [vmem:[%s4 + $0x28] sm:$0xff] %vm2569, %v2476
  %2576 = vst.msk [vmem:[%s4 + $0x30] sm:$0xff] %vm2569, %v2477
  %2577 = vst.msk [vmem:[%s4 + $0x38] sm:$0xff] %vm2569, %v2478
  %2578 = vst.msk [vmem:[%s4 + $0x40] sm:$0xff] %vm2569, %v2479
  %2579 = vst.msk [vmem:[%s4 + $0x48] sm:$0xff] %vm2569, %v2480
  %2580 = vst.msk [vmem:[%s4 + $0x50] sm:$0xff] %vm2569, %v2481
  %2581 = vst.msk [vmem:[%s4 + $0x58] sm:$0xff] %vm2569, %v2482
  %2582 = vst.msk [vmem:[%s4 + $0x60] sm:$0xff] %vm2569, %v2483
  %2583 = vst.msk [vmem:[%s4 + $0x68] sm:$0xff] %vm2569, %v2484
  %2584 = vst.msk [vmem:[%s4 + $0x70] sm:$0xff] %vm2569, %v2485
  %2585 = vst.msk [vmem:[%s4 + $0x78] sm:$0xff] %vm2569, %v2486
  %2586 = vst.msk [vmem:[%s4 + $0x80] sm:$0xff] %vm2569, %v2487
  %2587 = vst.msk [vmem:[%s4 + $0x88] sm:$0xff] %vm2569, %v2488
  %2588 = vst.msk [vmem:[%s4 + $0x90] sm:$0xff] %vm2569, %v2489
  %2589 = vst.msk [vmem:[%s4 + $0x98] sm:$0xff] %vm2569, %v2490
  %2590 = vst.msk [vmem:[%s4 + $0xa0] sm:$0xff] %vm2569, %v2491
  %2591 = vst.msk [vmem:[%s4 + $0xa8] sm:$0xff] %vm2569, %v2492
  %2592 = vst.msk [vmem:[%s4 + $0xb0] sm:$0xff] %vm2569, %v2493
  %2593 = vst.msk [vmem:[%s4 + $0xb8] sm:$0xff] %vm2569, %v2494
  %2594 = vst.msk [vmem:[%s4 + $0xc0] sm:$0xff] %vm2569, %v2495
  %2595 = vst.msk [vmem:[%s4 + $0xc8] sm:$0xff] %vm2569, %v2496
  %2596 = vst.msk [vmem:[%s4 + $0xd0] sm:$0xff] %vm2569, %v2497
  %2597 = vst.msk [vmem:[%s4 + $0xd8] sm:$0xff] %vm2569, %v2498
  %2598 = vst.msk [vmem:[%s4 + $0xe0] sm:$0xff] %vm2569, %v2499
  %2599 = vst.msk [vmem:[%s4 + $0xe8] sm:$0xff] %vm2569, %v2500
  %2600 = vst.msk [vmem:[%s4 + $0xf0] sm:$0xff] %vm2569, %v2501
  %2601 = vst.msk [vmem:[%s4 + $0xf8] sm:$0xff] %vm2569, %v2502
  %2602 = vst.msk [vmem:[%s4 + $0x100] sm:$0xff] %vm2569, %v2503
  %2603 = vst.msk [vmem:[%s4 + $0x108] sm:$0xff] %vm2569, %v2504
  %2604 = vst.msk [vmem:[%s4 + $0x110] sm:$0xff] %vm2569, %v2505
  %2605 = vst.msk [vmem:[%s4 + $0x118] sm:$0xff] %vm2569, %v2506
  %2606 = vst.msk [vmem:[%s4 + $0x120] sm:$0xff] %vm2569, %v2507
  %2607 = vst.msk [vmem:[%s4 + $0x128] sm:$0xff] %vm2569, %v2508
  %2608 = vst.msk [vmem:[%s4 + $0x130] sm:$0xff] %vm2569, %v2509
  %2609 = vst.msk [vmem:[%s4 + $0x138] sm:$0xff] %vm2569, %v2510
  %2610 = vst.msk [vmem:[%s4 + $0x140] sm:$0xff] %vm2569, %v2511
  %2611 = vst.msk [vmem:[%s4 + $0x148] sm:$0xff] %vm2569, %v2512
  %2612 = vst.msk [vmem:[%s4 + $0x150] sm:$0xff] %vm2569, %v2513
  %2613 = vst.msk [vmem:[%s4 + $0x158] sm:$0xff] %vm2569, %v2514
  %2614 = vst.msk [vmem:[%s4 + $0x160] sm:$0xff] %vm2569, %v2515
  %2615 = vst.msk [vmem:[%s4 + $0x168] sm:$0xff] %vm2569, %v2516
  %2616 = vst.msk [vmem:[%s4 + $0x170] sm:$0xff] %vm2569, %v2517
  %2617 = vst.msk [vmem:[%s4 + $0x178] sm:$0xff] %vm2569, %v2518
  %2618 = vst.msk [vmem:[%s4 + $0x180] sm:$0xff] %vm2569, %v2519
  %2619 = vst.msk [vmem:[%s4 + $0x188] sm:$0xff] %vm2569, %v2520
  %2620 = vst.msk [vmem:[%s4 + $0x190] sm:$0xff] %vm2569, %v2521
  %2621 = vst.msk [vmem:[%s4 + $0x198] sm:$0xff] %vm2569, %v2522
  %2622 = vst.msk [vmem:[%s4 + $0x1a0] sm:$0xff] %vm2569, %v2523
  %2623 = vst.msk [vmem:[%s4 + $0x1a8] sm:$0xff] %vm2569, %v2524
  %2624 = vst.msk [vmem:[%s4 + $0x1b0] sm:$0xff] %vm2569, %v2525
  %2625 = vst.msk [vmem:[%s4 + $0x1b8] sm:$0xff] %vm2569, %v2526
  %2626 = vst.msk [vmem:[%s4 + $0x1c0] sm:$0xff] %vm2569, %v2527
  %2627 = vst.msk [vmem:[%s4 + $0x1c8] sm:$0xff] %vm2569, %v2528
  %2628 = vst.msk [vmem:[%s4 + $0x1d0] sm:$0xff] %vm2569, %v2529
  %2629 = vst.msk [vmem:[%s4 + $0x1d8] sm:$0xff] %vm2569, %v2530
  %2630 = vst.msk [vmem:[%s4 + $0x1e0] sm:$0xff] %vm2569, %v2531
  %2631 = vst.msk [vmem:[%s4 + $0x1e8] sm:$0xff] %vm2569, %v2532
  %2632 = vst.msk [vmem:[%s4 + $0x1f0] sm:$0xff] %vm2569, %v2533
  %2633 = vst.msk [vmem:[%s4 + $0x1f8] sm:$0xff] %vm2569, %v2534
  %2634 = vst.msk [vmem:[%s4 + $0x200] sm:$0xff] %vm2569, %v2535
  %2635 = vst.msk [vmem:[%s4 + $0x208] sm:$0xff] %vm2569, %v2536
  %2636 = vst.msk [vmem:[%s4 + $0x210] sm:$0xff] %vm2569, %v2537
  %2637 = vst.msk [vmem:[%s4 + $0x218] sm:$0xff] %vm2569, %v2538
  %2638 = vst.msk [vmem:[%s4 + $0x220] sm:$0xff] %vm2569, %v2539
  %2639 = vst.msk [vmem:[%s4 + $0x228] sm:$0xff] %vm2569, %v2540
  %2640 = vst.msk [vmem:[%s4 + $0x230] sm:$0xff] %vm2569, %v2541
  %2641 = vst.msk [vmem:[%s4 + $0x238] sm:$0xff] %vm2569, %v2542
  %2642 = vst.msk [vmem:[%s4 + $0x240] sm:$0xff] %vm2569, %v2543
  %2643 = vst.msk [vmem:[%s4 + $0x248] sm:$0xff] %vm2569, %v2544
  %2644 = vst.msk [vmem:[%s4 + $0x250] sm:$0xff] %vm2569, %v2545
  %2645 = vst.msk [vmem:[%s4 + $0x258] sm:$0xff] %vm2569, %v2546
  %2646 = vst.msk [vmem:[%s4 + $0x260] sm:$0xff] %vm2569, %v2547
  %2647 = vst.msk [vmem:[%s4 + $0x268] sm:$0xff] %vm2569, %v2548
  %2648 = vst.msk [vmem:[%s4 + $0x270] sm:$0xff] %vm2569, %v2549
  %2649 = vst.msk [vmem:[%s4 + $0x278] sm:$0xff] %vm2569, %v2550
  %2650 = vst.msk [vmem:[%s4 + $0x280] sm:$0xff] %vm2569, %v2551
  %2651 = vst.msk [vmem:[%s4 + $0x288] sm:$0xff] %vm2569, %v2552
  %2652 = vst.msk [vmem:[%s4 + $0x290] sm:$0xff] %vm2569, %v2553
  %2653 = vst.msk [vmem:[%s4 + $0x298] sm:$0xff] %vm2569, %v2554
  %2654 = vst.msk [vmem:[%s4 + $0x2a0] sm:$0xff] %vm2569, %v2555
  %2655 = vst.msk [vmem:[%s4 + $0x2a8] sm:$0xff] %vm2569, %v2556
  %2656 = vst.msk [vmem:[%s4 + $0x2b0] sm:$0xff] %vm2569, %v2557
  %2657 = vst.msk [vmem:[%s4 + $0x2b8] sm:$0xff] %vm2569, %v2558
  %2658 = vst.msk [vmem:[%s4 + $0x2c0] sm:$0xff] %vm2569, %v2559
  %2659 = vst.msk [vmem:[%s4 + $0x2c8] sm:$0xff] %vm2569, %v2560
  %2660 = vst.msk [vmem:[%s4 + $0x2d0] sm:$0xff] %vm2569, %v2561
  %2661 = vst.msk [vmem:[%s4 + $0x2d8] sm:$0xff] %vm2569, %v2562
  %2662 = vst.msk [vmem:[%s4 + $0x2e0] sm:$0xff] %vm2569, %v2563
  %2663 = vst.msk [vmem:[%s4 + $0x2e8] sm:$0xff] %vm2569, %v2564
  %2664 = vst.msk [vmem:[%s4 + $0x2f0] sm:$0xff] %vm2569, %v2565
  %2665 = vst.msk [vmem:[%s4 + $0x2f8] sm:$0xff] %vm2569, %v2566
  %2666 = vst.msk [vmem:[%s4 + $0x300] sm:$0xff] %vm2569, %v2567
  %2667 = vst.msk [vmem:[%s4 + $0x308] sm:$0xff] %vm2569, %v2568
  // Predicated region
  $region18: #{se_module_forward.1} parent=0 // pred_check
    _
  $region19: #{se_module_forward.1} parent=0 // pred_check_branch
    %2669 = sbr.rel (0) target = $region21
  $region20: #{se_module_forward.1} parent=0 // pred_region
    _
  $region21: #{se_module_forward.1} parent=0 // pred_fallthru
    _
  // Predicated region
  $region22: #{se_module_forward.1} parent=0 // pred_check
    _
  $region23: #{se_module_forward.1} parent=0 // pred_check_branch
    %2671 = sbr.rel (0) target = $region25
  $region24: #{se_module_forward.1} parent=0 // pred_region
    _
  $region25: #{se_module_forward.1} parent=0 // pred_fallthru
    _

</llo_original>
